<compile_context>
chip_gen: v7x
topology: tpu7x:2x2x1
jax: 0.10.0
libtpu: 0.0.40
codegen_flags: <defaults>
</compile_context>

<pallas_src>
import jax
import jax.numpy as jnp
from jax.experimental import pallas as pl
from jax.experimental.pallas import tpu as pltpu


def acr_gnn_kernel(h0_ref, adj_ref, pool_ref, wself_ref, wrel_ref,
                   bcat_ref, bng_ref, bnb_ref, rw_ref, rb_ref, pw_ref, pb_ref,
                   out_ref, h_sc, acc_sc):
    """Grid = (layer l, relation r). Node state h carried in VMEM scratch across l;
    pre-activation accumulator carried across r."""
    l = pl.program_id(0)
    r = pl.program_id(1)
    n_layers = pl.num_programs(0)
    n_rel = pl.num_programs(1)
    n_nodes = h_sc.shape[0]

    # Load (padded) input features into the carried state on the very first step.
    @pl.when((l == 0) & (r == 0))
    def _():
        h_sc[...] = h0_ref[...]

    h_bf = h_sc[...].astype(jnp.bfloat16)                     # (N, Hp), layer input

    # ---- layer start: self-transform + fused (V_b + sum_r W_b) bias ----
    @pl.when(r == 0)
    def _():
        acc_sc[...] = (jnp.dot(h_bf, wself_ref[...],
                               preferred_element_type=jnp.float32)
                       + bcat_ref[pl.ds(l, 1), :])

    # ---- AGGREGATE + COMBINE for relation r (one K=Hp MXU pass per relation) ----
    adj_bf = adj_ref[...].astype(jnp.float32).astype(jnp.bfloat16)   # int8 {0,1} -> bf16
    agg = jnp.dot(adj_bf, h_bf, preferred_element_type=jnp.float32)  # (N, Hp)
    acc_sc[...] = acc_sc[...] + jnp.dot(agg.astype(jnp.bfloat16), wrel_ref[...],
                                        preferred_element_type=jnp.float32)

    # ---- READOUT (ACRConv, last layer only): factored through the (G, N) pooling ----
    @pl.when((r == n_rel - 1) & (l == n_layers - 1))
    def _():
        pooled = jnp.dot(pool_ref[...], h_bf,
                         preferred_element_type=jnp.float32)          # (G, Hp)
        ro = (jnp.dot(pooled.astype(jnp.bfloat16), rw_ref[...],
                      preferred_element_type=jnp.float32) + rb_ref[...])  # (G, Hp)
        # scatter back: pool^T @ ro without materializing pool^T (contract over G).
        scat = jax.lax.dot_general(
            pool_ref[...], ro.astype(jnp.bfloat16),
            dimension_numbers=(((0,), (0,)), ((), ())),
            preferred_element_type=jnp.float32)                        # (N, Hp)
        acc_sc[...] = acc_sc[...] + scat

    # ---- layer end: ReLU + training-mode BatchNorm1d (centered two-pass variance) ----
    @pl.when(r == n_rel - 1)
    def _():
        pre = jnp.maximum(acc_sc[...], 0.0)
        inv_n = 1.0 / n_nodes
        mean = jnp.sum(pre, axis=0, keepdims=True) * inv_n
        diff = pre - mean
        var = jnp.sum(diff * diff, axis=0, keepdims=True) * inv_n      # biased variance
        gamma = bng_ref[pl.ds(l, 1), :]
        beta = bnb_ref[pl.ds(l, 1), :]
        h_sc[...] = diff * jax.lax.rsqrt(var + 1e-5) * gamma + beta

    # ---- task == 'node': prediction head, written once on the final step ----
    @pl.when((r == n_rel - 1) & (l == n_layers - 1))
    def _():
        h_fin = h_sc[...].astype(jnp.bfloat16)
        out_ref[...] = (jnp.dot(h_fin, pw_ref[...],
                                preferred_element_type=jnp.float32) + pb_ref[...])


def single_acr_gnn_forward(x, adj, batch_assign, num_graphs, params):
    """Wrapper: lane padding, weight prep/casting, and pallas_call plumbing."""
    N, input_dim = x.shape
    L, R = adj.shape[0], adj.shape[1]
    H = params["vw"].shape[-1]
    O = params["pw"].shape[-1]
    Hp = max(((H + 127) // 128) * 128, 128)     # lane-dense hidden dim
    Op = max(((O + 127) // 128) * 128, 128)     # lane-dense output slab
    G = num_graphs

    # not self.bigger_input -> zero-pad input features to hidden_dim (and to Hp lanes).
    h0 = jnp.pad(x.astype(jnp.float32), ((0, 0), (0, Hp - input_dim)))

    # Densified per-relation adjacency, stored as int8 (values are exactly {0,1}).
    adj_i8 = adj.astype(jnp.int8)                                        # (L, R, N, N)

    # Readout pooling matrix: one_hot(batch) -> (G, N), exact {0,1}.
    pool = (jnp.arange(G, dtype=jnp.int32)[:, None]
            == batch_assign[None, :]).astype(jnp.bfloat16)               # (G, N)

    def pad_mat(w):   # pad last two dims (H, H) -> (Hp, Hp) with zeros
        return jnp.pad(w, [(0, 0)] * (w.ndim - 2) + [(0, Hp - H), (0, Hp - H)])

    def pad_vec(v):   # pad last dim H -> Hp with zeros
        return jnp.pad(v, [(0, 0)] * (v.ndim - 1) + [(0, Hp - H)]).astype(jnp.float32)

    wself = pad_mat(params["vw"]).astype(jnp.bfloat16)                   # (L, Hp, Hp)
    wrel = pad_mat(params["aw"]).astype(jnp.bfloat16)                    # (L, R, Hp, Hp)
    rw = pad_mat(params["rw"]).astype(jnp.bfloat16)                      # (Hp, Hp)
    rb = pad_vec(params["rb"])                                           # (1, Hp)
    bcat = pad_vec((params["vb"] + jnp.sum(params["ab"], axis=1))[:, 0, :])  # (L, Hp)
    bng = pad_vec(params["bng"][:, 0, :])                                # (L, Hp)
    bnb = pad_vec(params["bnb"][:, 0, :])                                # (L, Hp)
    pw = jnp.pad(params["pw"], ((0, Hp - H), (0, Op - O))).astype(jnp.bfloat16)  # (Hp, Op)
    pb = jnp.pad(params["pb"], ((0, 0), (0, Op - O))).astype(jnp.float32)        # (1, Op)

    grid_spec = pltpu.PrefetchScalarGridSpec(
        num_scalar_prefetch=0,
        grid=(L, R),
        in_specs=[
            pl.BlockSpec((N, Hp), lambda l, r: (0, 0)),                    # h0 (resident)
            pl.BlockSpec((None, None, N, N), lambda l, r: (l, r, 0, 0)),   # adj int8 per (l,r)
            pl.BlockSpec((G, N), lambda l, r: (0, 0)),                     # pool (resident)
            pl.BlockSpec((None, Hp, Hp), lambda l, r: (l, 0, 0)),          # V_l per layer
            pl.BlockSpec((None, None, Hp, Hp), lambda l, r: (l, r, 0, 0)), # W_{l,r} per step
            pl.BlockSpec((L, Hp), lambda l, r: (0, 0)),                    # fused bias (resident)
            pl.BlockSpec((L, Hp), lambda l, r: (0, 0)),                    # BN gamma (resident)
            pl.BlockSpec((L, Hp), lambda l, r: (0, 0)),                    # BN beta (resident)
            pl.BlockSpec((Hp, Hp), lambda l, r: (0, 0)),                   # readout weight
            pl.BlockSpec((1, Hp), lambda l, r: (0, 0)),                    # readout bias
            pl.BlockSpec((Hp, Op), lambda l, r: (0, 0)),                   # prediction weight
            pl.BlockSpec((1, Op), lambda l, r: (0, 0)),                    # prediction bias
        ],
        out_specs=pl.BlockSpec((N, Op), lambda l, r: (0, 0)),
        scratch_shapes=[pltpu.VMEM((N, Hp), jnp.float32),   # carried node state h
                        pltpu.VMEM((N, Hp), jnp.float32)],  # per-layer pre-activation acc
    )

    flops = (2 * L * R * (N * N * Hp + N * Hp * Hp)          # aggregate + per-rel combine
             + 2 * L * N * Hp * Hp                           # self transform
             + 2 * (2 * G * N * Hp + G * Hp * Hp)            # readout
             + 2 * N * Hp * Op)                              # prediction head
    bytes_accessed = (adj_i8.size
                      + 2 * (wself.size + wrel.size + rw.size + pw.size + pool.size)
                      + 4 * (h0.size + bcat.size + bng.size + bnb.size
                             + rb.size + pb.size + N * Op))
    cost = pl.CostEstimate(flops=flops, transcendentals=L * Hp,
                           bytes_accessed=bytes_accessed)

    out = pl.pallas_call(
        acr_gnn_kernel,
        out_shape=jax.ShapeDtypeStruct((N, Op), jnp.float32),
        grid_spec=grid_spec,
        compiler_params=pltpu.CompilerParams(
            dimension_semantics=("arbitrary", "arbitrary"),  # h carried across l, acc across r
            vmem_limit_bytes=32 * 1024 * 1024),
        cost_estimate=cost,
    )(h0, adj_i8, pool, wself, wrel, bcat, bng, bnb, rw, rb, pw, pb)
    return out[:, :O]


def make_params(key, hidden_dim, output_dim, num_layers_total, num_relation):
    """Deterministic synthetic parameter init (shapes dictated by the module __init__)."""
    H, O, L, R = hidden_dim, output_dim, num_layers_total, num_relation
    ks = jax.random.split(key, 8)
    scale = 0.1
    return {
        # self-transform per layer (Linear V):  (L, H, H) weights, (L, 1, H) bias
        "vw": scale * jax.random.normal(ks[0], (L, H, H), jnp.float32),
        "vb": scale * jax.random.normal(ks[1], (L, 1, H), jnp.float32),
        # per-relation aggregate transform:     (L, R, H, H), (L, R, 1, H)
        "aw": scale * jax.random.normal(ks[2], (L, R, H, H), jnp.float32),
        "ab": scale * jax.random.normal(ks[3], (L, R, 1, H), jnp.float32),
        # readout transform (ACRConv, last layer only)
        "rw": scale * jax.random.normal(ks[4], (H, H), jnp.float32),
        "rb": scale * jax.random.normal(ks[5], (1, H), jnp.float32),
        # BatchNorm1d affine params per layer
        "bng": jnp.ones((L, 1, H), jnp.float32),
        "bnb": jnp.zeros((L, 1, H), jnp.float32),
        # linear_prediction head
        "pw": scale * jax.random.normal(ks[6], (H, O), jnp.float32),
        "pb": scale * jax.random.normal(ks[7], (1, O), jnp.float32),
    }


if __name__ == "__main__":
    # Small shapes consistent with the module's forward.
    N = 32            # number of graph nodes
    INPUT_DIM = 8     # input_dim < hidden_dim  -> padding branch
    HIDDEN = 32       # hidden_dim
    OUTPUT = 8        # output_dim
    TIME_RANGE = 2
    NUM_LAYERS = 1    # per time step
    L = TIME_RANGE * NUM_LAYERS
    R = 5             # num_relation
    G = 4             # graphs per batch

    key = jax.random.PRNGKey(0)
    k_x, k_e, k_r, k_p = jax.random.split(key, 4)

    # Node features.
    x = jax.random.normal(k_x, (N, INPUT_DIM), jnp.float32)

    # Dense per-time, per-relation adjacency: adj[l, r, i, j] = 1 iff edge j->i with
    # edge_attr == r at time step l (densified edge_index / edge_attr).
    edge_mask = (jax.random.uniform(k_e, (L, N, N)) < 0.15).astype(jnp.float32)
    rel_type = jax.random.randint(k_r, (L, N, N), 0, R)
    adj = jnp.stack([edge_mask * (rel_type == r).astype(jnp.float32)
                     for r in range(R)], axis=1)                       # (L, R, N, N)

    # batch assigns nodes to graphs (same across time steps, node task).
    batch_assign = jnp.arange(N, dtype=jnp.int32) // (N // G)

    params = make_params(k_p, HIDDEN, OUTPUT, L, R)

    out = single_acr_gnn_forward(x, adj, batch_assign, G, params)
    out = jax.block_until_ready(out)
    assert out.shape == (N, OUTPUT)
    assert bool(jnp.all(jnp.isfinite(out)))
    print("KERNEL_OK")
</pallas_src>

<mosaic_0001>
module attributes {stable_mosaic.version = 11 : i64} {
  func.func @acr_gnn_kernel(%arg0: i32, %arg1: i32, %arg2: memref<32x128xf32, #tpu.memory_space<vmem>>, %arg3: memref<1x1x32x32xi8, #tpu.memory_space<vmem>>, %arg4: memref<4x32xbf16, #tpu.memory_space<vmem>>, %arg5: memref<1x128x128xbf16, #tpu.memory_space<vmem>>, %arg6: memref<1x1x128x128xbf16, #tpu.memory_space<vmem>>, %arg7: memref<2x128xf32, #tpu.memory_space<vmem>>, %arg8: memref<2x128xf32, #tpu.memory_space<vmem>>, %arg9: memref<2x128xf32, #tpu.memory_space<vmem>>, %arg10: memref<128x128xbf16, #tpu.memory_space<vmem>>, %arg11: memref<1x128xf32, #tpu.memory_space<vmem>>, %arg12: memref<128x128xbf16, #tpu.memory_space<vmem>>, %arg13: memref<1x128xf32, #tpu.memory_space<vmem>>, %arg14: memref<32x128xf32, #tpu.memory_space<vmem>>, %arg15: memref<32x128xf32, #tpu.memory_space<vmem>>, %arg16: memref<32x128xf32, #tpu.memory_space<vmem>>) attributes {dimension_semantics = [#tpu.dimension_semantics<arbitrary>, #tpu.dimension_semantics<arbitrary>], iteration_bounds = array<i64: 2, 5>, scalar_prefetch = 0 : i64, scratch_operands = 2 : i64, tpu.core_type = #tpu.core_type<tc>, window_params = [{pipeline_mode = #tpu.pipeline_mode<synchronous>, transform_indices = @transform_0, window_bounds = array<i64: 32, 128>}, {transform_indices = @transform_1, window_bounds = array<i64: 1, 1, 32, 32>}, {pipeline_mode = #tpu.pipeline_mode<synchronous>, transform_indices = @transform_2, window_bounds = array<i64: 4, 32>}, {transform_indices = @transform_3, window_bounds = array<i64: 1, 128, 128>}, {transform_indices = @transform_4, window_bounds = array<i64: 1, 1, 128, 128>}, {pipeline_mode = #tpu.pipeline_mode<synchronous>, transform_indices = @transform_5, window_bounds = array<i64: 2, 128>}, {pipeline_mode = #tpu.pipeline_mode<synchronous>, transform_indices = @transform_6, window_bounds = array<i64: 2, 128>}, {pipeline_mode = #tpu.pipeline_mode<synchronous>, transform_indices = @transform_7, window_bounds = array<i64: 2, 128>}, {pipeline_mode = #tpu.pipeline_mode<synchronous>, transform_indices = @transform_8, window_bounds = array<i64: 128, 128>}, {pipeline_mode = #tpu.pipeline_mode<synchronous>, transform_indices = @transform_9, window_bounds = array<i64: 1, 128>}, {pipeline_mode = #tpu.pipeline_mode<synchronous>, transform_indices = @transform_10, window_bounds = array<i64: 128, 128>}, {pipeline_mode = #tpu.pipeline_mode<synchronous>, transform_indices = @transform_11, window_bounds = array<i64: 1, 128>}, {pipeline_mode = #tpu.pipeline_mode<synchronous>, transform_indices = @transform_12, window_bounds = array<i64: 32, 128>}]} {
    %c0_i32 = arith.constant 0 : i32
    %0 = arith.cmpi eq, %arg0, %c0_i32 : i32
    %c0_i32_0 = arith.constant 0 : i32
    %1 = arith.cmpi eq, %arg1, %c0_i32_0 : i32
    %2 = arith.andi %0, %1 : i1
    %3 = arith.extui %2 : i1 to i32
    %c0_i32_1 = arith.constant 0 : i32
    %4 = arith.cmpi ne, %3, %c0_i32_1 : i32
    scf.if %4 {
      %c0_24 = arith.constant 0 : index
      %c0_25 = arith.constant 0 : index
      %35 = vector.load %arg2[%c0_24, %c0_25] : memref<32x128xf32, #tpu.memory_space<vmem>>, vector<32x128xf32>
      %c0_26 = arith.constant 0 : index
      %c0_27 = arith.constant 0 : index
      %36 = vector.load %arg15[%c0_26, %c0_27] : memref<32x128xf32, #tpu.memory_space<vmem>>, vector<32x128xf32>
      tpu.vector_store %arg15[%c0_26, %c0_27], %35 {strides = array<i32>} : memref<32x128xf32, #tpu.memory_space<vmem>>, vector<32x128xf32>,
    } else {
    }
    %c0 = arith.constant 0 : index
    %c0_2 = arith.constant 0 : index
    %5 = vector.load %arg15[%c0, %c0_2] : memref<32x128xf32, #tpu.memory_space<vmem>>, vector<32x128xf32>
    %6 = arith.truncf %5 : vector<32x128xf32> to vector<32x128xbf16>
    %c0_i32_3 = arith.constant 0 : i32
    %7 = arith.cmpi eq, %arg1, %c0_i32_3 : i32
    %8 = arith.extui %7 : i1 to i32
    %c0_i32_4 = arith.constant 0 : i32
    %9 = arith.cmpi ne, %8, %c0_i32_4 : i32
    scf.if %9 {
      %c0_24 = arith.constant 0 : index
      %c0_25 = arith.constant 0 : index
      %c0_26 = arith.constant 0 : index
      %35 = vector.load %arg5[%c0_24, %c0_25, %c0_26] : memref<1x128x128xbf16, #tpu.memory_space<vmem>>, vector<1x128x128xbf16>
      %36 = vector.shape_cast %35 : vector<1x128x128xbf16> to vector<128x128xbf16>
      %cst_27 = arith.constant dense<0.000000e+00> : vector<32x128xf32>
      %37 = tpu.matmul %6, %36, %cst_27 {dimension_numbers = #tpu.dot_dimension_numbers<[1], [0], [0], [1], [0, 0, 1, 1], [], []>} : vector<32x128xbf16>, vector<128x128xbf16>, vector<32x128xf32> -> vector<32x128xf32>
      %38 = arith.index_cast %arg0 : i32 to index
      %c0_28 = arith.constant 0 : index
      %39 = vector.load %arg7[%38, %c0_28] : memref<2x128xf32, #tpu.memory_space<vmem>>, vector<1x128xf32>
      %40 = vector.broadcast %39 : vector<1x128xf32> to vector<32x128xf32>
      %41 = arith.addf %37, %40 : vector<32x128xf32>
      %c0_29 = arith.constant 0 : index
      %c0_30 = arith.constant 0 : index
      %42 = vector.load %arg16[%c0_29, %c0_30] : memref<32x128xf32, #tpu.memory_space<vmem>>, vector<32x128xf32>
      tpu.vector_store %arg16[%c0_29, %c0_30], %41 {strides = array<i32>} : memref<32x128xf32, #tpu.memory_space<vmem>>, vector<32x128xf32>,
    } else {
    }
    %c0_5 = arith.constant 0 : index
    %c0_6 = arith.constant 0 : index
    %c0_7 = arith.constant 0 : index
    %c0_8 = arith.constant 0 : index
    %10 = vector.load %arg3[%c0_5, %c0_6, %c0_7, %c0_8] : memref<1x1x32x32xi8, #tpu.memory_space<vmem>>, vector<1x1x32x32xi8>
    %11 = vector.shape_cast %10 : vector<1x1x32x32xi8> to vector<32x32xi8>
    %12 = arith.sitofp %11 : vector<32x32xi8> to vector<32x32xf32>
    %13 = arith.truncf %12 : vector<32x32xf32> to vector<32x32xbf16>
    %cst = arith.constant dense<0.000000e+00> : vector<32x128xf32>
    %14 = tpu.matmul %13, %6, %cst {dimension_numbers = #tpu.dot_dimension_numbers<[1], [0], [0], [1], [0, 0, 1, 1], [], []>} : vector<32x32xbf16>, vector<32x128xbf16>, vector<32x128xf32> -> vector<32x128xf32>
    %c0_9 = arith.constant 0 : index
    %c0_10 = arith.constant 0 : index
    %15 = vector.load %arg16[%c0_9, %c0_10] : memref<32x128xf32, #tpu.memory_space<vmem>>, vector<32x128xf32>
    %16 = arith.truncf %14 : vector<32x128xf32> to vector<32x128xbf16>
    %c0_11 = arith.constant 0 : index
    %c0_12 = arith.constant 0 : index
    %c0_13 = arith.constant 0 : index
    %c0_14 = arith.constant 0 : index
    %17 = vector.load %arg6[%c0_11, %c0_12, %c0_13, %c0_14] : memref<1x1x128x128xbf16, #tpu.memory_space<vmem>>, vector<1x1x128x128xbf16>
    %18 = vector.shape_cast %17 : vector<1x1x128x128xbf16> to vector<128x128xbf16>
    %cst_15 = arith.constant dense<0.000000e+00> : vector<32x128xf32>
    %19 = tpu.matmul %16, %18, %cst_15 {dimension_numbers = #tpu.dot_dimension_numbers<[1], [0], [0], [1], [0, 0, 1, 1], [], []>} : vector<32x128xbf16>, vector<128x128xbf16>, vector<32x128xf32> -> vector<32x128xf32>
    %20 = arith.addf %15, %19 : vector<32x128xf32>
    %c0_16 = arith.constant 0 : index
    %c0_17 = arith.constant 0 : index
    %21 = vector.load %arg16[%c0_16, %c0_17] : memref<32x128xf32, #tpu.memory_space<vmem>>, vector<32x128xf32>
    tpu.vector_store %arg16[%c0_16, %c0_17], %20 {strides = array<i32>} : memref<32x128xf32, #tpu.memory_space<vmem>>, vector<32x128xf32>,
    %c4_i32 = arith.constant 4 : i32
    %22 = arith.cmpi eq, %arg1, %c4_i32 : i32
    %c1_i32 = arith.constant 1 : i32
    %23 = arith.cmpi eq, %arg0, %c1_i32 : i32
    %24 = arith.andi %22, %23 : i1
    %25 = arith.extui %24 : i1 to i32
    %c0_i32_18 = arith.constant 0 : i32
    %26 = arith.cmpi ne, %25, %c0_i32_18 : i32
    scf.if %26 {
      %c0_24 = arith.constant 0 : index
      %c0_25 = arith.constant 0 : index
      %35 = vector.load %arg4[%c0_24, %c0_25] : memref<4x32xbf16, #tpu.memory_space<vmem>>, vector<4x32xbf16>
      %cst_26 = arith.constant dense<0.000000e+00> : vector<4x128xf32>
      %36 = tpu.matmul %35, %6, %cst_26 {dimension_numbers = #tpu.dot_dimension_numbers<[1], [0], [0], [1], [0, 0, 1, 1], [], []>} : vector<4x32xbf16>, vector<32x128xbf16>, vector<4x128xf32> -> vector<4x128xf32>
      %37 = arith.truncf %36 : vector<4x128xf32> to vector<4x128xbf16>
      %c0_27 = arith.constant 0 : index
      %c0_28 = arith.constant 0 : index
      %38 = vector.load %arg10[%c0_27, %c0_28] : memref<128x128xbf16, #tpu.memory_space<vmem>>, vector<128x128xbf16>
      %cst_29 = arith.constant dense<0.000000e+00> : vector<4x128xf32>
      %39 = tpu.matmul %37, %38, %cst_29 {dimension_numbers = #tpu.dot_dimension_numbers<[1], [0], [0], [1], [0, 0, 1, 1], [], []>} : vector<4x128xbf16>, vector<128x128xbf16>, vector<4x128xf32> -> vector<4x128xf32>
      %c0_30 = arith.constant 0 : index
      %c0_31 = arith.constant 0 : index
      %40 = vector.load %arg11[%c0_30, %c0_31] : memref<1x128xf32, #tpu.memory_space<vmem>>, vector<1x128xf32>
      %41 = vector.broadcast %40 : vector<1x128xf32> to vector<4x128xf32>
      %42 = arith.addf %39, %41 : vector<4x128xf32>
      %c0_32 = arith.constant 0 : index
      %c0_33 = arith.constant 0 : index
      %43 = vector.load %arg4[%c0_32, %c0_33] : memref<4x32xbf16, #tpu.memory_space<vmem>>, vector<4x32xbf16>
      %44 = arith.truncf %42 : vector<4x128xf32> to vector<4x128xbf16>
      %cst_34 = arith.constant dense<0.000000e+00> : vector<32x128xf32>
      %45 = tpu.matmul %43, %44, %cst_34 {dimension_numbers = #tpu.dot_dimension_numbers<[0], [0], [1], [1], [0, 1, 1, 1], [], []>} : vector<4x32xbf16>, vector<4x128xbf16>, vector<32x128xf32> -> vector<32x128xf32>
      %c0_35 = arith.constant 0 : index
      %c0_36 = arith.constant 0 : index
      %46 = vector.load %arg16[%c0_35, %c0_36] : memref<32x128xf32, #tpu.memory_space<vmem>>, vector<32x128xf32>
      %47 = arith.addf %46, %45 : vector<32x128xf32>
      %c0_37 = arith.constant 0 : index
      %c0_38 = arith.constant 0 : index
      %48 = vector.load %arg16[%c0_37, %c0_38] : memref<32x128xf32, #tpu.memory_space<vmem>>, vector<32x128xf32>
      tpu.vector_store %arg16[%c0_37, %c0_38], %47 {strides = array<i32>} : memref<32x128xf32, #tpu.memory_space<vmem>>, vector<32x128xf32>,
    } else {
    }
    %c4_i32_19 = arith.constant 4 : i32
    %27 = arith.cmpi eq, %arg1, %c4_i32_19 : i32
    %28 = arith.extui %27 : i1 to i32
    %c0_i32_20 = arith.constant 0 : i32
    %29 = arith.cmpi ne, %28, %c0_i32_20 : i32
    scf.if %29 {
      %c0_24 = arith.constant 0 : index
      %c0_25 = arith.constant 0 : index
      %35 = vector.load %arg16[%c0_24, %c0_25] : memref<32x128xf32, #tpu.memory_space<vmem>>, vector<32x128xf32>
      %cst_26 = arith.constant 0.000000e+00 : f32
      %36 = vector.broadcast %cst_26 : f32 to vector<32x128xf32>
      %37 = arith.maximumf %35, %36 : vector<32x128xf32>
      %cst_27 = arith.constant dense<0.000000e+00> : vector<128xf32>
      %38 = vector.multi_reduction <add>, %37, %cst_27 [0] : vector<32x128xf32> to vector<128xf32>
      %39 = vector.shape_cast %38 : vector<128xf32> to vector<1x128xf32>
      %cst_28 = arith.constant 3.125000e-02 : f32
      %40 = vector.broadcast %cst_28 : f32 to vector<1x128xf32>
      %41 = arith.mulf %39, %40 : vector<1x128xf32>
      %42 = vector.broadcast %41 : vector<1x128xf32> to vector<32x128xf32>
      %43 = arith.subf %37, %42 : vector<32x128xf32>
      %44 = arith.mulf %43, %43 : vector<32x128xf32>
      %cst_29 = arith.constant dense<0.000000e+00> : vector<128xf32>
      %45 = vector.multi_reduction <add>, %44, %cst_29 [0] : vector<32x128xf32> to vector<128xf32>
      %46 = vector.shape_cast %45 : vector<128xf32> to vector<1x128xf32>
      %cst_30 = arith.constant 3.125000e-02 : f32
      %47 = vector.broadcast %cst_30 : f32 to vector<1x128xf32>
      %48 = arith.mulf %46, %47 : vector<1x128xf32>
      %49 = arith.index_cast %arg0 : i32 to index
      %c0_31 = arith.constant 0 : index
      %50 = vector.load %arg8[%49, %c0_31] : memref<2x128xf32, #tpu.memory_space<vmem>>, vector<1x128xf32>
      %51 = arith.index_cast %arg0 : i32 to index
      %c0_32 = arith.constant 0 : index
      %52 = vector.load %arg9[%51, %c0_32] : memref<2x128xf32, #tpu.memory_space<vmem>>, vector<1x128xf32>
      %cst_33 = arith.constant 9.99999974E-6 : f32
      %53 = vector.broadcast %cst_33 : f32 to vector<1x128xf32>
      %54 = arith.addf %48, %53 : vector<1x128xf32>
      %55 = math.rsqrt %54 : vector<1x128xf32>
      %56 = vector.broadcast %55 : vector<1x128xf32> to vector<32x128xf32>
      %57 = arith.mulf %43, %56 : vector<32x128xf32>
      %58 = vector.broadcast %50 : vector<1x128xf32> to vector<32x128xf32>
      %59 = arith.mulf %57, %58 : vector<32x128xf32>
      %60 = vector.broadcast %52 : vector<1x128xf32> to vector<32x128xf32>
      %61 = arith.addf %59, %60 : vector<32x128xf32>
      %c0_34 = arith.constant 0 : index
      %c0_35 = arith.constant 0 : index
      %62 = vector.load %arg15[%c0_34, %c0_35] : memref<32x128xf32, #tpu.memory_space<vmem>>, vector<32x128xf32>
      tpu.vector_store %arg15[%c0_34, %c0_35], %61 {strides = array<i32>} : memref<32x128xf32, #tpu.memory_space<vmem>>, vector<32x128xf32>,
    } else {
    }
    %c4_i32_21 = arith.constant 4 : i32
    %30 = arith.cmpi eq, %arg1, %c4_i32_21 : i32
    %c1_i32_22 = arith.constant 1 : i32
    %31 = arith.cmpi eq, %arg0, %c1_i32_22 : i32
    %32 = arith.andi %30, %31 : i1
    %33 = arith.extui %32 : i1 to i32
    %c0_i32_23 = arith.constant 0 : i32
    %34 = arith.cmpi ne, %33, %c0_i32_23 : i32
    scf.if %34 {
      %c0_24 = arith.constant 0 : index
      %c0_25 = arith.constant 0 : index
      %35 = vector.load %arg15[%c0_24, %c0_25] : memref<32x128xf32, #tpu.memory_space<vmem>>, vector<32x128xf32>
      %36 = arith.truncf %35 : vector<32x128xf32> to vector<32x128xbf16>
      %c0_26 = arith.constant 0 : index
      %c0_27 = arith.constant 0 : index
      %37 = vector.load %arg12[%c0_26, %c0_27] : memref<128x128xbf16, #tpu.memory_space<vmem>>, vector<128x128xbf16>
      %cst_28 = arith.constant dense<0.000000e+00> : vector<32x128xf32>
      %38 = tpu.matmul %36, %37, %cst_28 {dimension_numbers = #tpu.dot_dimension_numbers<[1], [0], [0], [1], [0, 0, 1, 1], [], []>} : vector<32x128xbf16>, vector<128x128xbf16>, vector<32x128xf32> -> vector<32x128xf32>
      %c0_29 = arith.constant 0 : index
      %c0_30 = arith.constant 0 : index
      %39 = vector.load %arg13[%c0_29, %c0_30] : memref<1x128xf32, #tpu.memory_space<vmem>>, vector<1x128xf32>
      %40 = vector.broadcast %39 : vector<1x128xf32> to vector<32x128xf32>
      %41 = arith.addf %38, %40 : vector<32x128xf32>
      %c0_31 = arith.constant 0 : index
      %c0_32 = arith.constant 0 : index
      %42 = vector.load %arg14[%c0_31, %c0_32] : memref<32x128xf32, #tpu.memory_space<vmem>>, vector<32x128xf32>
      tpu.vector_store %arg14[%c0_31, %c0_32], %41 {strides = array<i32>} : memref<32x128xf32, #tpu.memory_space<vmem>>, vector<32x128xf32>,
    } else {
    }
    return
  }
  func.func @transform_0(%arg0: i32, %arg1: i32) -> (i32, i32) {
    %c0_i32 = arith.constant 0 : i32
    %c0_i32_0 = arith.constant 0 : i32
    %c0_i32_1 = arith.constant 0 : i32
    return %c0_i32, %c0_i32_0 : i32, i32
  }
  func.func @transform_1(%arg0: i32, %arg1: i32) -> (i32, i32, i32, i32) {
    %c0_i32 = arith.constant 0 : i32
    %c0_i32_0 = arith.constant 0 : i32
    %c0_i32_1 = arith.constant 0 : i32
    return %arg0, %arg1, %c0_i32, %c0_i32_0 : i32, i32, i32, i32
  }
  func.func @transform_2(%arg0: i32, %arg1: i32) -> (i32, i32) {
    %c0_i32 = arith.constant 0 : i32
    %c0_i32_0 = arith.constant 0 : i32
    %c0_i32_1 = arith.constant 0 : i32
    return %c0_i32, %c0_i32_0 : i32, i32
  }
  func.func @transform_3(%arg0: i32, %arg1: i32) -> (i32, i32, i32) {
    %c0_i32 = arith.constant 0 : i32
    %c0_i32_0 = arith.constant 0 : i32
    %c0_i32_1 = arith.constant 0 : i32
    return %arg0, %c0_i32, %c0_i32_0 : i32, i32, i32
  }
  func.func @transform_4(%arg0: i32, %arg1: i32) -> (i32, i32, i32, i32) {
    %c0_i32 = arith.constant 0 : i32
    %c0_i32_0 = arith.constant 0 : i32
    %c0_i32_1 = arith.constant 0 : i32
    return %arg0, %arg1, %c0_i32, %c0_i32_0 : i32, i32, i32, i32
  }
  func.func @transform_5(%arg0: i32, %arg1: i32) -> (i32, i32) {
    %c0_i32 = arith.constant 0 : i32
    %c0_i32_0 = arith.constant 0 : i32
    %c0_i32_1 = arith.constant 0 : i32
    return %c0_i32, %c0_i32_0 : i32, i32
  }
  func.func @transform_6(%arg0: i32, %arg1: i32) -> (i32, i32) {
    %c0_i32 = arith.constant 0 : i32
    %c0_i32_0 = arith.constant 0 : i32
    %c0_i32_1 = arith.constant 0 : i32
    return %c0_i32, %c0_i32_0 : i32, i32
  }
  func.func @transform_7(%arg0: i32, %arg1: i32) -> (i32, i32) {
    %c0_i32 = arith.constant 0 : i32
    %c0_i32_0 = arith.constant 0 : i32
    %c0_i32_1 = arith.constant 0 : i32
    return %c0_i32, %c0_i32_0 : i32, i32
  }
  func.func @transform_8(%arg0: i32, %arg1: i32) -> (i32, i32) {
    %c0_i32 = arith.constant 0 : i32
    %c0_i32_0 = arith.constant 0 : i32
    %c0_i32_1 = arith.constant 0 : i32
    return %c0_i32, %c0_i32_0 : i32, i32
  }
  func.func @transform_9(%arg0: i32, %arg1: i32) -> (i32, i32) {
    %c0_i32 = arith.constant 0 : i32
    %c0_i32_0 = arith.constant 0 : i32
    %c0_i32_1 = arith.constant 0 : i32
    return %c0_i32, %c0_i32_0 : i32, i32
  }
  func.func @transform_10(%arg0: i32, %arg1: i32) -> (i32, i32) {
    %c0_i32 = arith.constant 0 : i32
    %c0_i32_0 = arith.constant 0 : i32
    %c0_i32_1 = arith.constant 0 : i32
    return %c0_i32, %c0_i32_0 : i32, i32
  }
  func.func @transform_11(%arg0: i32, %arg1: i32) -> (i32, i32) {
    %c0_i32 = arith.constant 0 : i32
    %c0_i32_0 = arith.constant 0 : i32
    %c0_i32_1 = arith.constant 0 : i32
    return %c0_i32, %c0_i32_0 : i32, i32
  }
  func.func @transform_12(%arg0: i32, %arg1: i32) -> (i32, i32) {
    %c0_i32 = arith.constant 0 : i32
    %c0_i32_0 = arith.constant 0 : i32
    %c0_i32_1 = arith.constant 0 : i32
    return %c0_i32, %c0_i32_0 : i32, i32
  }
}

</mosaic_0001>

<llo_original>
// kernel: tpu_custom_call.1
$region0: #{tpu_custom_call.1}
  #allocation0 [shape = 'u32[]', space=smem, size = 0x4, offset = 0x4, fixed_abs, tag = 'smem constant byte address 0x4 - core index']
  #allocation1 [shape = 'u32[144,128]{1,0:T(1,128)}', space=vmem, size = 0x12000, scoped, tag = 'internal scratch']
  #allocation2 [shape = 'f32[32,128]{1,0:T(8,128)}', space=vmem, size = 0x4000, scoped, tag = 'scratch operand']
  #allocation3 [shape = 'f32[32,128]{1,0:T(8,128)}', space=vmem, size = 0x4000, scoped, tag = 'scratch operand']
  %s0 = inlined_call_operand.hbm [shape: f32[32,128], index: 0, kind: input, shape index: {}]
  %s1 = inlined_call_operand.hbm [shape: s8[2,5,32,32], index: 1, kind: input, shape index: {}]
  %s2 = inlined_call_operand.vmem [shape: bf16[4,32], index: 2, kind: input, shape index: {}]
  %s3 = inlined_call_operand.hbm [shape: bf16[2,128,128], index: 3, kind: input, shape index: {}]
  %s4 = inlined_call_operand.hbm [shape: bf16[2,5,128,128], index: 4, kind: input, shape index: {}]
  %s5 = inlined_call_operand.vmem [shape: f32[2,128], index: 5, kind: input, shape index: {}]
  %s6 = inlined_call_operand.vmem [shape: f32[2,128], index: 6, kind: input, shape index: {}]
  %s7 = inlined_call_operand.vmem [shape: f32[2,128], index: 7, kind: input, shape index: {}]
  %s8 = inlined_call_operand.hbm [shape: bf16[128,128], index: 8, kind: input, shape index: {}]
  %s9 = inlined_call_operand.vmem [shape: f32[1,128], index: 9, kind: input, shape index: {}]
  %s10 = inlined_call_operand.hbm [shape: bf16[128,128], index: 10, kind: input, shape index: {}]
  %s11 = inlined_call_operand.vmem [shape: f32[1,128], index: 11, kind: input, shape index: {}]
  %s12 = inlined_call_operand.hbm [shape: f32[32,128], index: 12, kind: output, shape index: {}]
  %s13 = sld [smem:[#allocation0]]
  $region125: #{tpu_custom_call.1} parent=0
    _
  %s15 = ssub.s32 1, %s13
  %s16 = scalar_select 0, %s15, %s13
  $region1: #{tpu_custom_call.1} parent=0
    #allocation4 [shape = 'u8[16384]{0}', space=vmem, size = 0x4000, scoped, tag = 'input window, operand 0, single buffered']
    #allocation5 [shape = 's32[2]{0}', space=sflag, size = 0x8, scoped, tag = 'scoped memory for tpu_custom_call.1']
    #allocation6 [shape = 's32[2]{0}', space=sflag, size = 0x8, scoped, tag = 'scoped memory for tpu_custom_call.1']
    #allocation7 [shape = 'u8[8192]{0}', space=vmem, size = 0x2000, scoped, tag = 'input window, operand 1']
    #allocation8 [shape = 's32[2]{0}', space=sflag, size = 0x8, scoped, tag = 'scoped memory for tpu_custom_call.1']
    #allocation9 [shape = 'u8[65536]{0}', space=vmem, size = 0x10000, scoped, tag = 'input window, operand 3']
    #allocation10 [shape = 'u8[65536]{0}', space=vmem, size = 0x10000, scoped, tag = 'input window, operand 4']
    #allocation11 [shape = 's32[2]{0}', space=sflag, size = 0x8, scoped, tag = 'scoped memory for tpu_custom_call.1']
    #allocation12 [shape = 'u8[32768]{0}', space=vmem, size = 0x8000, scoped, tag = 'input window, operand 8, single buffered']
    #allocation13 [shape = 'u8[32768]{0}', space=vmem, size = 0x8000, scoped, tag = 'input window, operand 10, single buffered']
    #allocation14 [shape = 's32[1]{0}', space=sflag, size = 0x4, scoped, tag = 'scoped memory for tpu_custom_call.1']
    #allocation15 [shape = 'u8[16384]{0}', space=vmem, size = 0x4000, scoped, tag = 'output window, operand 0, single buffered']
    %17 = vsyncpa [#allocation5], 0
    %18 = vsyncpa [#allocation8], 0
    %s19 = scalar_lea.sflag [#allocation8], 1
    %20 = vsyncpa %s19, 0
    %21 = vsyncpa [#allocation11], 0
    %s22 = scalar_lea.sflag [#allocation11], 1
    %23 = vsyncpa %s22, 0
    %24 = vsyncpa [#allocation14], 0
    %25 = vsyncpa [#allocation6], 0
    loop: start=0, step=1, limit=12
    $region2: #{tpu_custom_call.1} parent=1 // loop_pre_header
      _
    $region3: #{tpu_custom_call.1} parent=1 // loop_header
      %s27 = sphi 0, %s31
      %p28 = scmp.ge.s32.totalorder %s27, 12
      %s34 = sphi 0, %s46
      %s35 = sphi 0, %s42
      %s36 = sphi 0, %s34
      %s37 = sphi 0, %s35
      %s38 = sphi 0, %s36
      %s39 = sphi 0, %s37
      %s47 = sphi 0, %s47
      %s49 = sphi 0, %s47
      %s50 = sphi 0, %s49
      %s64 = sphi 0, %s50
      %s72 = sphi 0, %s74
      %s75 = sphi 0, %s72
      %s76 = sphi 0, %s75
      %s92 = sphi 0, %s76
      %s96 = sphi 0, %s96
      %s98 = sphi 0, %s96
      %s99 = sphi 0, %s98
      %s113 = sphi 0, %s99
      %s119 = sphi 0, %s121
      %s122 = sphi 0, %s119
      %s123 = sphi 0, %s122
      %s139 = sphi 0, %s123
      %s147 = sphi 0, %s149
      %s150 = sphi 0, %s147
      %s151 = sphi 0, %s150
      %s167 = sphi 0, %s151
      %s171 = sphi 0, %s171
      %s173 = sphi 0, %s171
      %s174 = sphi 0, %s173
      %s188 = sphi 0, %s174
      %s192 = sphi 0, %s192
      %s194 = sphi 0, %s192
      %s195 = sphi 0, %s194
      %s209 = sphi 0, %s195
      %s213 = sphi 0, %s213
      %s215 = sphi 0, %s213
      %s216 = sphi 0, %s215
      %s230 = sphi 0, %s216
      %s234 = sphi 0, %s234
      %s236 = sphi 0, %s234
      %s237 = sphi 0, %s236
      %s251 = sphi 0, %s237
      %s255 = sphi 0, %s255
      %s257 = sphi 0, %s255
      %s258 = sphi 0, %s257
      %s272 = sphi 0, %s258
      %s276 = sphi 0, %s276
      %s278 = sphi 0, %s276
      %s279 = sphi 0, %s278
      %s293 = sphi 0, %s279
      %s297 = sphi 0, %s297
      %s299 = sphi 0, %s297
      %s300 = sphi 0, %s299
      %s314 = sphi 0, %s300
      %s318 = sphi 0, %s318
      %s320 = sphi 0, %s318
      %s321 = sphi 0, %s320
      %s335 = sphi 0, %s321
    $region4: #{tpu_custom_call.1} parent=1 // loop_header_branch
      %30 = sbr.rel (%p28) target = $region8
    $region5: #{tpu_custom_call.1} parent=1 // loop_body
      %s32 = ssub.s32 %s27, 1
      %s33 = ssub.s32 %s27, 2
      %s40 = sadd.s32 1, %s35
      %p41 = scmp.ge.s32.totalorder %s40, 5
      %s42 = scalar_select %p41, 0, %s40
      %s43 = sadd.s32 1, %s34
      %s44 = scalar_select %p41, %s43, %s34
      %p45 = scmp.ge.s32.totalorder %s44, 2
      %s46 = scalar_select %p45, 0, %s44
      %s48 = sadd.s32 %s47, 1
      %p51 = scmp.eq.s32.totalorder %s27, 9
      %p52 = scmp.ne.s32.totalorder %s47, %s49
      %p53 = scmp.eq.s32.totalorder %s27, 0
      %p54 = por %p52, %p53
      %p55 = scmp.ne.s32.totalorder %s47, %s49
      %p56 = scmp.eq.s32.totalorder %s32, 9
      %p57 = por %p55, %p56
      %p58 = scmp.ne.s32.totalorder %s49, %s50
      %p59 = scmp.eq.s32.totalorder %s32, 0
      %p60 = por %p58, %p59
      %p61 = scmp.ne.s32.totalorder %s49, %s50
      %p62 = scmp.eq.s32.totalorder %s33, 9
      %p63 = por %p61, %p62
      %p65 = scmp.ne.s32.totalorder %s50, %s64
      %p66 = scmp.eq.s32.totalorder %s33, 0
      %p67 = por %p65, %p66
      %s68 = ssub.s32 %s34, %s46
      %s69 = ssub.s32 %s35, %s42
      %s70 = sor.u32 %s68, %s69
      %p71 = scmp.eq.s32.totalorder %s70, 0
      %s73 = sadd.s32 %s72, 1
      %s74 = scalar_select %p71, %s72, %s73
      %p77 = pneg %p71
      %p78 = scmp.eq.s32.totalorder %s27, 9
      %p79 = por %p77, %p78
      %p80 = scmp.ne.s32.totalorder %s72, %s75
      %p81 = scmp.eq.s32.totalorder %s27, 0
      %p82 = por %p80, %p81
      %p83 = scmp.ne.s32.totalorder %s72, %s75
      %p84 = scmp.eq.s32.totalorder %s32, 9
      %p85 = por %p83, %p84
      %p86 = scmp.ne.s32.totalorder %s75, %s76
      %p87 = scmp.eq.s32.totalorder %s32, 0
      %p88 = por %p86, %p87
      %p89 = scmp.ne.s32.totalorder %s75, %s76
      %p90 = scmp.eq.s32.totalorder %s33, 9
      %p91 = por %p89, %p90
      %p93 = scmp.ne.s32.totalorder %s76, %s92
      %p94 = scmp.eq.s32.totalorder %s33, 0
      %p95 = por %p93, %p94
      %s97 = sadd.s32 %s96, 1
      %p100 = scmp.eq.s32.totalorder %s27, 9
      %p101 = scmp.ne.s32.totalorder %s96, %s98
      %p102 = scmp.eq.s32.totalorder %s27, 0
      %p103 = por %p101, %p102
      %p104 = scmp.ne.s32.totalorder %s96, %s98
      %p105 = scmp.eq.s32.totalorder %s32, 9
      %p106 = por %p104, %p105
      %p107 = scmp.ne.s32.totalorder %s98, %s99
      %p108 = scmp.eq.s32.totalorder %s32, 0
      %p109 = por %p107, %p108
      %p110 = scmp.ne.s32.totalorder %s98, %s99
      %p111 = scmp.eq.s32.totalorder %s33, 9
      %p112 = por %p110, %p111
      %p114 = scmp.ne.s32.totalorder %s99, %s113
      %p115 = scmp.eq.s32.totalorder %s33, 0
      %p116 = por %p114, %p115
      %s117 = ssub.s32 %s34, %s46
      %p118 = scmp.eq.s32.totalorder %s117, 0
      %s120 = sadd.s32 %s119, 1
      %s121 = scalar_select %p118, %s119, %s120
      %p124 = pneg %p118
      %p125 = scmp.eq.s32.totalorder %s27, 9
      %p126 = por %p124, %p125
      %p127 = scmp.ne.s32.totalorder %s119, %s122
      %p128 = scmp.eq.s32.totalorder %s27, 0
      %p129 = por %p127, %p128
      %p130 = scmp.ne.s32.totalorder %s119, %s122
      %p131 = scmp.eq.s32.totalorder %s32, 9
      %p132 = por %p130, %p131
      %p133 = scmp.ne.s32.totalorder %s122, %s123
      %p134 = scmp.eq.s32.totalorder %s32, 0
      %p135 = por %p133, %p134
      %p136 = scmp.ne.s32.totalorder %s122, %s123
      %p137 = scmp.eq.s32.totalorder %s33, 9
      %p138 = por %p136, %p137
      %p140 = scmp.ne.s32.totalorder %s123, %s139
      %p141 = scmp.eq.s32.totalorder %s33, 0
      %p142 = por %p140, %p141
      %s143 = ssub.s32 %s34, %s46
      %s144 = ssub.s32 %s35, %s42
      %s145 = sor.u32 %s143, %s144
      %p146 = scmp.eq.s32.totalorder %s145, 0
      %s148 = sadd.s32 %s147, 1
      %s149 = scalar_select %p146, %s147, %s148
      %p152 = pneg %p146
      %p153 = scmp.eq.s32.totalorder %s27, 9
      %p154 = por %p152, %p153
      %p155 = scmp.ne.s32.totalorder %s147, %s150
      %p156 = scmp.eq.s32.totalorder %s27, 0
      %p157 = por %p155, %p156
      %p158 = scmp.ne.s32.totalorder %s147, %s150
      %p159 = scmp.eq.s32.totalorder %s32, 9
      %p160 = por %p158, %p159
      %p161 = scmp.ne.s32.totalorder %s150, %s151
      %p162 = scmp.eq.s32.totalorder %s32, 0
      %p163 = por %p161, %p162
      %p164 = scmp.ne.s32.totalorder %s150, %s151
      %p165 = scmp.eq.s32.totalorder %s33, 9
      %p166 = por %p164, %p165
      %p168 = scmp.ne.s32.totalorder %s151, %s167
      %p169 = scmp.eq.s32.totalorder %s33, 0
      %p170 = por %p168, %p169
      %s172 = sadd.s32 %s171, 1
      %p175 = scmp.eq.s32.totalorder %s27, 9
      %p176 = scmp.ne.s32.totalorder %s171, %s173
      %p177 = scmp.eq.s32.totalorder %s27, 0
      %p178 = por %p176, %p177
      %p179 = scmp.ne.s32.totalorder %s171, %s173
      %p180 = scmp.eq.s32.totalorder %s32, 9
      %p181 = por %p179, %p180
      %p182 = scmp.ne.s32.totalorder %s173, %s174
      %p183 = scmp.eq.s32.totalorder %s32, 0
      %p184 = por %p182, %p183
      %p185 = scmp.ne.s32.totalorder %s173, %s174
      %p186 = scmp.eq.s32.totalorder %s33, 9
      %p187 = por %p185, %p186
      %p189 = scmp.ne.s32.totalorder %s174, %s188
      %p190 = scmp.eq.s32.totalorder %s33, 0
      %p191 = por %p189, %p190
      %s193 = sadd.s32 %s192, 1
      %p196 = scmp.eq.s32.totalorder %s27, 9
      %p197 = scmp.ne.s32.totalorder %s192, %s194
      %p198 = scmp.eq.s32.totalorder %s27, 0
      %p199 = por %p197, %p198
      %p200 = scmp.ne.s32.totalorder %s192, %s194
      %p201 = scmp.eq.s32.totalorder %s32, 9
      %p202 = por %p200, %p201
      %p203 = scmp.ne.s32.totalorder %s194, %s195
      %p204 = scmp.eq.s32.totalorder %s32, 0
      %p205 = por %p203, %p204
      %p206 = scmp.ne.s32.totalorder %s194, %s195
      %p207 = scmp.eq.s32.totalorder %s33, 9
      %p208 = por %p206, %p207
      %p210 = scmp.ne.s32.totalorder %s195, %s209
      %p211 = scmp.eq.s32.totalorder %s33, 0
      %p212 = por %p210, %p211
      %s214 = sadd.s32 %s213, 1
      %p217 = scmp.eq.s32.totalorder %s27, 9
      %p218 = scmp.ne.s32.totalorder %s213, %s215
      %p219 = scmp.eq.s32.totalorder %s27, 0
      %p220 = por %p218, %p219
      %p221 = scmp.ne.s32.totalorder %s213, %s215
      %p222 = scmp.eq.s32.totalorder %s32, 9
      %p223 = por %p221, %p222
      %p224 = scmp.ne.s32.totalorder %s215, %s216
      %p225 = scmp.eq.s32.totalorder %s32, 0
      %p226 = por %p224, %p225
      %p227 = scmp.ne.s32.totalorder %s215, %s216
      %p228 = scmp.eq.s32.totalorder %s33, 9
      %p229 = por %p227, %p228
      %p231 = scmp.ne.s32.totalorder %s216, %s230
      %p232 = scmp.eq.s32.totalorder %s33, 0
      %p233 = por %p231, %p232
      %s235 = sadd.s32 %s234, 1
      %p238 = scmp.eq.s32.totalorder %s27, 9
      %p239 = scmp.ne.s32.totalorder %s234, %s236
      %p240 = scmp.eq.s32.totalorder %s27, 0
      %p241 = por %p239, %p240
      %p242 = scmp.ne.s32.totalorder %s234, %s236
      %p243 = scmp.eq.s32.totalorder %s32, 9
      %p244 = por %p242, %p243
      %p245 = scmp.ne.s32.totalorder %s236, %s237
      %p246 = scmp.eq.s32.totalorder %s32, 0
      %p247 = por %p245, %p246
      %p248 = scmp.ne.s32.totalorder %s236, %s237
      %p249 = scmp.eq.s32.totalorder %s33, 9
      %p250 = por %p248, %p249
      %p252 = scmp.ne.s32.totalorder %s237, %s251
      %p253 = scmp.eq.s32.totalorder %s33, 0
      %p254 = por %p252, %p253
      %s256 = sadd.s32 %s255, 1
      %p259 = scmp.eq.s32.totalorder %s27, 9
      %p260 = scmp.ne.s32.totalorder %s255, %s257
      %p261 = scmp.eq.s32.totalorder %s27, 0
      %p262 = por %p260, %p261
      %p263 = scmp.ne.s32.totalorder %s255, %s257
      %p264 = scmp.eq.s32.totalorder %s32, 9
      %p265 = por %p263, %p264
      %p266 = scmp.ne.s32.totalorder %s257, %s258
      %p267 = scmp.eq.s32.totalorder %s32, 0
      %p268 = por %p266, %p267
      %p269 = scmp.ne.s32.totalorder %s257, %s258
      %p270 = scmp.eq.s32.totalorder %s33, 9
      %p271 = por %p269, %p270
      %p273 = scmp.ne.s32.totalorder %s258, %s272
      %p274 = scmp.eq.s32.totalorder %s33, 0
      %p275 = por %p273, %p274
      %s277 = sadd.s32 %s276, 1
      %p280 = scmp.eq.s32.totalorder %s27, 9
      %p281 = scmp.ne.s32.totalorder %s276, %s278
      %p282 = scmp.eq.s32.totalorder %s27, 0
      %p283 = por %p281, %p282
      %p284 = scmp.ne.s32.totalorder %s276, %s278
      %p285 = scmp.eq.s32.totalorder %s32, 9
      %p286 = por %p284, %p285
      %p287 = scmp.ne.s32.totalorder %s278, %s279
      %p288 = scmp.eq.s32.totalorder %s32, 0
      %p289 = por %p287, %p288
      %p290 = scmp.ne.s32.totalorder %s278, %s279
      %p291 = scmp.eq.s32.totalorder %s33, 9
      %p292 = por %p290, %p291
      %p294 = scmp.ne.s32.totalorder %s279, %s293
      %p295 = scmp.eq.s32.totalorder %s33, 0
      %p296 = por %p294, %p295
      %s298 = sadd.s32 %s297, 1
      %p301 = scmp.eq.s32.totalorder %s27, 9
      %p302 = scmp.ne.s32.totalorder %s297, %s299
      %p303 = scmp.eq.s32.totalorder %s27, 0
      %p304 = por %p302, %p303
      %p305 = scmp.ne.s32.totalorder %s297, %s299
      %p306 = scmp.eq.s32.totalorder %s32, 9
      %p307 = por %p305, %p306
      %p308 = scmp.ne.s32.totalorder %s299, %s300
      %p309 = scmp.eq.s32.totalorder %s32, 0
      %p310 = por %p308, %p309
      %p311 = scmp.ne.s32.totalorder %s299, %s300
      %p312 = scmp.eq.s32.totalorder %s33, 9
      %p313 = por %p311, %p312
      %p315 = scmp.ne.s32.totalorder %s300, %s314
      %p316 = scmp.eq.s32.totalorder %s33, 0
      %p317 = por %p315, %p316
      %s319 = sadd.s32 %s318, 1
      %p322 = scmp.eq.s32.totalorder %s27, 9
      %p323 = scmp.ne.s32.totalorder %s318, %s320
      %p324 = scmp.eq.s32.totalorder %s27, 0
      %p325 = por %p323, %p324
      %p326 = scmp.ne.s32.totalorder %s318, %s320
      %p327 = scmp.eq.s32.totalorder %s32, 9
      %p328 = por %p326, %p327
      %p329 = scmp.ne.s32.totalorder %s320, %s321
      %p330 = scmp.eq.s32.totalorder %s32, 0
      %p331 = por %p329, %p330
      %p332 = scmp.ne.s32.totalorder %s320, %s321
      %p333 = scmp.eq.s32.totalorder %s33, 9
      %p334 = por %p332, %p333
      %p336 = scmp.ne.s32.totalorder %s321, %s335
      %p337 = scmp.eq.s32.totalorder %s33, 0
      %p338 = por %p336, %p337
      %p339 = scmp.le.s32.totalorder 1, %s27
      %p340 = scmp.lt.s32.totalorder %s27, 11
      %p341 = pnand %p339, %p340
      %p342 = pneg %p341
      // Predicated region
      $region9: #{tpu_custom_call.1} parent=5 // pred_check
        _
      $region10: #{tpu_custom_call.1} parent=5 // pred_check_branch
        %344 = sbr.rel (%p341) target = $region12
      $region11: #{tpu_custom_call.1} parent=5 // pred_region
        %s345 = ssub.s32 %s27, 1
        // Predicated region
        $region13: #{tpu_custom_call.1} parent=11 // pred_check
          %p346 = pneg %p60
        $region14: #{tpu_custom_call.1} parent=11 // pred_check_branch
          %348 = sbr.rel (%p346) target = $region16
        $region15: #{tpu_custom_call.1} parent=11 // pred_region
          %s350 = ssub.s32 512, 512
          %351 = vsyncadd [#allocation5], %s350
          %s352 = sshll.u32 [#allocation4], 4
          %s353 = int_to_ptr.vmem [resolvable:$true] %s352
          %358 = dma.hbm_to_vmem [thread:$0]  %s0, 512, %s353, [#allocation5], 128, 128, 8
        $region16: #{tpu_custom_call.1} parent=11 // pred_fallthru
          _
        // Predicated region
        $region17: #{tpu_custom_call.1} parent=11 // pred_check
          %p359 = pneg %p109
        $region18: #{tpu_custom_call.1} parent=11 // pred_check_branch
          %361 = sbr.rel (%p359) target = $region20
        $region19: #{tpu_custom_call.1} parent=11 // pred_region
          _
        $region20: #{tpu_custom_call.1} parent=11 // pred_fallthru
          _
        // Predicated region
        $region21: #{tpu_custom_call.1} parent=11 // pred_check
          %p362 = pneg %p184
        $region22: #{tpu_custom_call.1} parent=11 // pred_check_branch
          %364 = sbr.rel (%p362) target = $region24
        $region23: #{tpu_custom_call.1} parent=11 // pred_region
          _
        $region24: #{tpu_custom_call.1} parent=11 // pred_fallthru
          _
        // Predicated region
        $region25: #{tpu_custom_call.1} parent=11 // pred_check
          %p365 = pneg %p205
        $region26: #{tpu_custom_call.1} parent=11 // pred_check_branch
          %367 = sbr.rel (%p365) target = $region28
        $region27: #{tpu_custom_call.1} parent=11 // pred_region
          _
        $region28: #{tpu_custom_call.1} parent=11 // pred_fallthru
          _
        // Predicated region
        $region29: #{tpu_custom_call.1} parent=11 // pred_check
          %p368 = pneg %p226
        $region30: #{tpu_custom_call.1} parent=11 // pred_check_branch
          %370 = sbr.rel (%p368) target = $region32
        $region31: #{tpu_custom_call.1} parent=11 // pred_region
          _
        $region32: #{tpu_custom_call.1} parent=11 // pred_fallthru
          _
        // Predicated region
        $region33: #{tpu_custom_call.1} parent=11 // pred_check
          %p371 = pneg %p247
        $region34: #{tpu_custom_call.1} parent=11 // pred_check_branch
          %373 = sbr.rel (%p371) target = $region36
        $region35: #{tpu_custom_call.1} parent=11 // pred_region
          %s375 = ssub.s32 1024, 1024
          %376 = vsyncadd [#allocation11], %s375
          %s377 = sshll.u32 [#allocation12], 4
          %s378 = int_to_ptr.vmem [resolvable:$true] %s377
          %383 = dma.hbm_to_vmem [thread:$0]  %s8, 1024, %s378, [#allocation11], 64, 64, 4
        $region36: #{tpu_custom_call.1} parent=11 // pred_fallthru
          _
        // Predicated region
        $region37: #{tpu_custom_call.1} parent=11 // pred_check
          %p384 = pneg %p268
        $region38: #{tpu_custom_call.1} parent=11 // pred_check_branch
          %386 = sbr.rel (%p384) target = $region40
        $region39: #{tpu_custom_call.1} parent=11 // pred_region
          _
        $region40: #{tpu_custom_call.1} parent=11 // pred_fallthru
          _
        // Predicated region
        $region41: #{tpu_custom_call.1} parent=11 // pred_check
          %p387 = pneg %p289
        $region42: #{tpu_custom_call.1} parent=11 // pred_check_branch
          %389 = sbr.rel (%p387) target = $region44
        $region43: #{tpu_custom_call.1} parent=11 // pred_region
          %s391 = ssub.s32 1024, 1024
          %392 = vsyncadd [#allocation14], %s391
          %s393 = sshll.u32 [#allocation13], 4
          %s394 = int_to_ptr.vmem [resolvable:$true] %s393
          %399 = dma.hbm_to_vmem [thread:$0]  %s10, 1024, %s394, [#allocation14], 64, 64, 4
        $region44: #{tpu_custom_call.1} parent=11 // pred_fallthru
          _
        // Predicated region
        $region45: #{tpu_custom_call.1} parent=11 // pred_check
          %p400 = pneg %p310
        $region46: #{tpu_custom_call.1} parent=11 // pred_check_branch
          %402 = sbr.rel (%p400) target = $region48
        $region47: #{tpu_custom_call.1} parent=11 // pred_region
          _
        $region48: #{tpu_custom_call.1} parent=11 // pred_fallthru
          _
      $region12: #{tpu_custom_call.1} parent=5 // pred_fallthru
        _
      %p403 = scmp.lt.s32.totalorder %s27, 10
      // Predicated region
      $region49: #{tpu_custom_call.1} parent=5 // pred_check
        %p404 = pneg %p403
      $region50: #{tpu_custom_call.1} parent=5 // pred_check_branch
        %406 = sbr.rel (%p404) target = $region52
      $region51: #{tpu_custom_call.1} parent=5 // pred_region
        // Predicated region
        $region53: #{tpu_custom_call.1} parent=51 // pred_check
          %p407 = pneg %p82
        $region54: #{tpu_custom_call.1} parent=51 // pred_check_branch
          %409 = sbr.rel (%p407) target = $region56
        $region55: #{tpu_custom_call.1} parent=51 // pred_region
          %s410 = sand.u32 %s27, 1
          %s411 = scalar_lea.sflag [#allocation8], %s410
          %s412 = sand.u32 %s72, 1
          %s413 = smul.addr %s412, 8
          %s414 = scalar_lea.vmem [#allocation7], %s413
          %s416 = ssub.s32 128, 128
          %417 = vsyncadd %s411, %s416
          %s418 = smul.addr %s34, 5
          %s419 = sadd.s32 %s35, %s418
          %s420 = smul.addr %s419, 128
          %s421 = scalar_lea.hbm %s1, %s420
          %s423 = sshll.u32 %s414, 4
          %s424 = int_to_ptr.vmem [resolvable:$true] %s423
          %426 = dma.hbm_to_vmem [thread:$0]  %s421, 128, %s424, %s411
        $region56: #{tpu_custom_call.1} parent=51 // pred_fallthru
          _
        // Predicated region
        $region57: #{tpu_custom_call.1} parent=51 // pred_check
          %p427 = pneg %p129
        $region58: #{tpu_custom_call.1} parent=51 // pred_check_branch
          %429 = sbr.rel (%p427) target = $region60
        $region59: #{tpu_custom_call.1} parent=51 // pred_region
          %s430 = sand.u32 %s27, 1
          %s431 = scalar_lea.sflag [#allocation8], %s430
          %s432 = sand.u32 %s119, 1
          %s433 = smul.addr %s432, 64
          %s434 = scalar_lea.vmem [#allocation9], %s433
          %s436 = ssub.s32 1024, 1024
          %437 = vsyncadd %s431, %s436
          %s438 = smul.addr %s34, 16
          %s439 = smul.addr %s438, 64
          %s440 = scalar_lea.hbm %s3, %s439
          %s441 = sshll.u32 %s434, 4
          %s442 = int_to_ptr.vmem [resolvable:$true] %s441
          %447 = dma.hbm_to_vmem [thread:$0]  %s440, 1024, %s442, %s431, 64, 64, 4
        $region60: #{tpu_custom_call.1} parent=51 // pred_fallthru
          _
        // Predicated region
        $region61: #{tpu_custom_call.1} parent=51 // pred_check
          %p448 = pneg %p157
        $region62: #{tpu_custom_call.1} parent=51 // pred_check_branch
          %450 = sbr.rel (%p448) target = $region64
        $region63: #{tpu_custom_call.1} parent=51 // pred_region
          %s451 = sand.u32 %s27, 1
          %s452 = scalar_lea.sflag [#allocation11], %s451
          %s453 = sand.u32 %s147, 1
          %s454 = smul.addr %s453, 64
          %s455 = scalar_lea.vmem [#allocation10], %s454
          %s457 = ssub.s32 1024, 1024
          %458 = vsyncadd %s452, %s457
          %s459 = smul.addr %s35, 16
          %s460 = smul.addr %s34, 80
          %s461 = sadd.s32 %s459, %s460
          %s462 = smul.addr %s461, 64
          %s463 = scalar_lea.hbm %s4, %s462
          %s464 = sshll.u32 %s455, 4
          %s465 = int_to_ptr.vmem [resolvable:$true] %s464
          %470 = dma.hbm_to_vmem [thread:$0]  %s463, 1024, %s465, %s452, 64, 64, 4
        $region64: #{tpu_custom_call.1} parent=51 // pred_fallthru
          _
      $region52: #{tpu_custom_call.1} parent=5 // pred_fallthru
        _
      %p471 = scmp.le.s32.totalorder 1, %s27
      %p472 = scmp.lt.s32.totalorder %s27, 11
      %p473 = pnand %p471, %p472
      %p474 = pneg %p473
      // Predicated region
      $region65: #{tpu_custom_call.1} parent=5 // pred_check
        _
      $region66: #{tpu_custom_call.1} parent=5 // pred_check_branch
        %476 = sbr.rel (%p473) target = $region68
      $region67: #{tpu_custom_call.1} parent=5 // pred_region
        %s477 = ssub.s32 %s27, 1
        // Predicated region
        $region69: #{tpu_custom_call.1} parent=67 // pred_check
          %p478 = pneg %p60
        $region70: #{tpu_custom_call.1} parent=67 // pred_check_branch
          %480 = sbr.rel (%p478) target = $region72
        $region71: #{tpu_custom_call.1} parent=67 // pred_region
          %481 = dma.done [#allocation5], 512
        $region72: #{tpu_custom_call.1} parent=67 // pred_fallthru
          _
        %s482 = sand.u32 %s32, 1
        %s483 = scalar_lea.sflag [#allocation8], %s482
        %s484 = sand.u32 %s75, 1
        %s485 = smul.addr %s484, 8
        %s486 = scalar_lea.vmem [#allocation7], %s485
        // Predicated region
        $region73: #{tpu_custom_call.1} parent=67 // pred_check
          %p487 = pneg %p88
        $region74: #{tpu_custom_call.1} parent=67 // pred_check_branch
          %489 = sbr.rel (%p487) target = $region76
        $region75: #{tpu_custom_call.1} parent=67 // pred_region
          %490 = dma.done %s483, 128
        $region76: #{tpu_custom_call.1} parent=67 // pred_fallthru
          _
        %s491 = sand.u32 %s32, 1
        %s492 = scalar_lea.sflag [#allocation8], %s491
        %s493 = sand.u32 %s122, 1
        %s494 = smul.addr %s493, 64
        %s495 = scalar_lea.vmem [#allocation9], %s494
        // Predicated region
        $region77: #{tpu_custom_call.1} parent=67 // pred_check
          %p496 = pneg %p135
        $region78: #{tpu_custom_call.1} parent=67 // pred_check_branch
          %498 = sbr.rel (%p496) target = $region80
        $region79: #{tpu_custom_call.1} parent=67 // pred_region
          %499 = dma.done %s492, 1024
        $region80: #{tpu_custom_call.1} parent=67 // pred_fallthru
          _
        %s500 = sand.u32 %s32, 1
        %s501 = scalar_lea.sflag [#allocation11], %s500
        %s502 = sand.u32 %s150, 1
        %s503 = smul.addr %s502, 64
        %s504 = scalar_lea.vmem [#allocation10], %s503
        // Predicated region
        $region81: #{tpu_custom_call.1} parent=67 // pred_check
          %p505 = pneg %p163
        $region82: #{tpu_custom_call.1} parent=67 // pred_check_branch
          %507 = sbr.rel (%p505) target = $region84
        $region83: #{tpu_custom_call.1} parent=67 // pred_region
          %508 = dma.done %s501, 1024
        $region84: #{tpu_custom_call.1} parent=67 // pred_fallthru
          _
        // Predicated region
        $region85: #{tpu_custom_call.1} parent=67 // pred_check
          %p509 = pneg %p247
        $region86: #{tpu_custom_call.1} parent=67 // pred_check_branch
          %511 = sbr.rel (%p509) target = $region88
        $region87: #{tpu_custom_call.1} parent=67 // pred_region
          %512 = dma.done [#allocation11], 1024
        $region88: #{tpu_custom_call.1} parent=67 // pred_fallthru
          _
        // Predicated region
        $region89: #{tpu_custom_call.1} parent=67 // pred_check
          %p513 = pneg %p289
        $region90: #{tpu_custom_call.1} parent=67 // pred_check_branch
          %515 = sbr.rel (%p513) target = $region92
        $region91: #{tpu_custom_call.1} parent=67 // pred_region
          %516 = dma.done [#allocation14], 1024
        $region92: #{tpu_custom_call.1} parent=67 // pred_fallthru
          _
        %p517 = pneg %p60
        %p518 = pneg %p57
        %s519 = sand.u32 %s32, 1
        %s520 = scalar_lea.sflag [#allocation8], %s519
        %s521 = sand.u32 %s75, 1
        %s522 = smul.addr %s521, 8
        %s523 = scalar_lea.vmem [#allocation7], %s522
        %p524 = pneg %p88
        %p525 = pneg %p85
        %p526 = pneg %p109
        %p527 = pneg %p106
        %s528 = sand.u32 %s32, 1
        %s529 = scalar_lea.sflag [#allocation8], %s528
        %s530 = sand.u32 %s122, 1
        %s531 = smul.addr %s530, 64
        %s532 = scalar_lea.vmem [#allocation9], %s531
        %p533 = pneg %p135
        %p534 = pneg %p132
        %s535 = sand.u32 %s32, 1
        %s536 = scalar_lea.sflag [#allocation11], %s535
        %s537 = sand.u32 %s150, 1
        %s538 = smul.addr %s537, 64
        %s539 = scalar_lea.vmem [#allocation10], %s538
        %p540 = pneg %p163
        %p541 = pneg %p160
        %p542 = pneg %p184
        %p543 = pneg %p181
        %p544 = pneg %p205
        %p545 = pneg %p202
        %p546 = pneg %p226
        %p547 = pneg %p223
        %p548 = pneg %p247
        %p549 = pneg %p244
        %p550 = pneg %p268
        %p551 = pneg %p265
        %p552 = pneg %p289
        %p553 = pneg %p286
        %p554 = pneg %p310
        %p555 = pneg %p307
        %p556 = pneg %p331
        %p557 = pneg %p328
        %p559 = scmp.eq.s32.totalorder %s36, 0
        %p560 = scmp.eq.s32.totalorder %s37, 0
        %p561 = pnand %p559, %p560
        %p562 = pneg %p561
        // Predicated region
        $region93: #{tpu_custom_call.1} parent=67 // pred_check
          _
        $region94: #{tpu_custom_call.1} parent=67 // pred_check_branch
          %564 = sbr.rel (%p561) target = $region96
        $region95: #{tpu_custom_call.1} parent=67 // pred_region
          %v565 = vld [vmem:[#allocation4] sm:$0xff]
          %v566 = vld [vmem:[#allocation4 + $0x8] sm:$0xff]
          %v567 = vld [vmem:[#allocation4 + $0x10] sm:$0xff]
          %v568 = vld [vmem:[#allocation4 + $0x18] sm:$0xff]
          %569 = vst [vmem:[#allocation2] sm:$0xff] %v565
          %570 = vst [vmem:[#allocation2 + $0x8] sm:$0xff] %v566
          %571 = vst [vmem:[#allocation2 + $0x10] sm:$0xff] %v567
          %572 = vst [vmem:[#allocation2 + $0x18] sm:$0xff] %v568
        $region96: #{tpu_custom_call.1} parent=67 // pred_fallthru
          _
        %v573 = vld [vmem:[#allocation2] sm:$0xff]
        %v574 = vld [vmem:[#allocation2 + $0x8] sm:$0xff]
        %v575 = vld [vmem:[#allocation2 + $0x10] sm:$0xff]
        %v576 = vld [vmem:[#allocation2 + $0x18] sm:$0xff]
        %v577 = vpack.c.bf16 %v574, %v573
        %v578 = vpack.c.bf16 %v576, %v575
        // Predicated region
        $region97: #{tpu_custom_call.1} parent=67 // pred_check
          %p579 = pneg %p560
        $region98: #{tpu_custom_call.1} parent=67 // pred_check_branch
          %581 = sbr.rel (%p579) target = $region100
        $region99: #{tpu_custom_call.1} parent=67 // pred_region
          %v582 = vld [vmem:[%s495] sm:$0xf]
          %v583 = vld [vmem:[%s495 + $0x4] sm:$0xf]
          %v584 = vld [vmem:[%s495 + $0x8] sm:$0xf]
          %v585 = vld [vmem:[%s495 + $0xc] sm:$0xf]
          %v586 = vld [vmem:[%s495 + $0x10] sm:$0xf]
          %v587 = vld [vmem:[%s495 + $0x14] sm:$0xf]
          %v588 = vld [vmem:[%s495 + $0x18] sm:$0xf]
          %v589 = vld [vmem:[%s495 + $0x1c] sm:$0xf]
          %v590 = vld [vmem:[%s495 + $0x20] sm:$0xf]
          %v591 = vld [vmem:[%s495 + $0x24] sm:$0xf]
          %v592 = vld [vmem:[%s495 + $0x28] sm:$0xf]
          %v593 = vld [vmem:[%s495 + $0x2c] sm:$0xf]
          %v594 = vld [vmem:[%s495 + $0x30] sm:$0xf]
          %v595 = vld [vmem:[%s495 + $0x34] sm:$0xf]
          %v596 = vld [vmem:[%s495 + $0x38] sm:$0xf]
          %v597 = vld [vmem:[%s495 + $0x3c] sm:$0xf]
          %s598 = scalar_lea.vmem %s5, %s36
          %v599 = vld [vmem:[%s598] sm:$0x1]
          %v600 = vlaneseq
          %v601 = vshrl.u32 %v600, 7
          %v602 = vsub.s32 0, %v601
          %v603 = vrot.slane %v599, %v602
          %v620 = vunpack.c.l.b16 %v582
          %v621 = vunpack.c.l.b16 %v583
          %v622 = vunpack.c.l.b16 %v584
          %v623 = vunpack.c.l.b16 %v585
          %v624 = vunpack.c.l.b16 %v586
          %v625 = vunpack.c.l.b16 %v587
          %v626 = vunpack.c.l.b16 %v588
          %v627 = vunpack.c.l.b16 %v589
          %v628 = vunpack.c.l.b16 %v590
          %v629 = vunpack.c.l.b16 %v591
          %v630 = vunpack.c.l.b16 %v592
          %v631 = vunpack.c.l.b16 %v593
          %v632 = vunpack.c.l.b16 %v594
          %v633 = vunpack.c.l.b16 %v595
          %v634 = vunpack.c.l.b16 %v596
          %v635 = vunpack.c.l.b16 %v597
          %v636 = vpack.c.b16 %v621, %v620
          %v637 = vpack.c.b16 %v623, %v622
          %v638 = vpack.c.b16 %v625, %v624
          %v639 = vpack.c.b16 %v627, %v626
          %v640 = vpack.c.b16 %v629, %v628
          %v641 = vpack.c.b16 %v631, %v630
          %v642 = vpack.c.b16 %v633, %v632
          %v643 = vpack.c.b16 %v635, %v634
          %652 = vmatprep.subr.bf16.mxu0 0
          %653 = vmatpush1.bf16.msra.mxu0 %v636
          %654 = vmatprep.subr.bf16.mxu0 0
          %655 = vmatpush1.bf16.msra.mxu0 %v637
          %656 = vmatprep.subr.bf16.mxu0 0
          %657 = vmatpush1.bf16.msra.mxu0 %v638
          %658 = vmatprep.subr.bf16.mxu0 0
          %659 = vmatpush1.bf16.msra.mxu0 %v639
          %660 = vmatprep.subr.bf16.mxu0 0
          %661 = vmatpush1.bf16.msra.mxu0 %v640
          %662 = vmatprep.subr.bf16.mxu0 0
          %663 = vmatpush1.bf16.msra.mxu0 %v641
          %664 = vmatprep.subr.bf16.mxu0 0
          %665 = vmatpush1.bf16.msra.mxu0 %v642
          %666 = vmatprep.subr.bf16.mxu0 0
          %667 = vmatpush1.bf16.msra.mxu0 %v643
          %668 = vmatprep.subr.bf16.mxu0 0
          %669 = vmatpush1.bf16.msra.mxu0 0
          %670 = vmatprep.subr.bf16.mxu0 0
          %671 = vmatpush1.bf16.msra.mxu0 0
          %672 = vmatprep.subr.bf16.mxu0 0
          %673 = vmatpush1.bf16.msra.mxu0 0
          %674 = vmatprep.subr.bf16.mxu0 0
          %675 = vmatpush1.bf16.msra.mxu0 0
          %676 = vmatprep.subr.bf16.mxu0 0
          %677 = vmatpush1.bf16.msra.mxu0 0
          %678 = vmatprep.subr.bf16.mxu0 0
          %679 = vmatpush1.bf16.msra.mxu0 0
          %680 = vmatprep.subr.bf16.mxu0 0
          %681 = vmatpush1.bf16.msra.mxu0 0
          %682 = vmatprep.subr.bf16.mxu0 0
          %683 = vmatpush1.bf16.msra.mxu0 0
          %684 = vmatprep.mubr.bf16.mxu0 0
          %685 = vmatmul.mubr.bf16.gmra.mrb[0].mxu0 %v577
          %v686 = vpop.f32.mrb[0].mxu0
          %v687 = vadd.f32 %v603, %v686
          %v688 = vpop.f32.mrb[0].mxu0
          %v689 = vpop.f32.mrb[0].mxu0
          %v690 = vadd.f32 %v603, %v689
          %v691 = vpop.f32.mrb[0].mxu0
          %692 = vmatprep.mubr.bf16.mxu0 0
          %693 = vmatmul.mubr.bf16.gmra.mrb[0].mxu0 %v578
          %v694 = vpop.f32.mrb[0].mxu0
          %v695 = vadd.f32 %v603, %v694
          %v696 = vpop.f32.mrb[0].mxu0
          %v697 = vpop.f32.mrb[0].mxu0
          %v698 = vadd.f32 %v603, %v697
          %v699 = vpop.f32.mrb[0].mxu0
          %700 = vdwg.mxu0
          %701 = vst [vmem:[#allocation3] sm:$0xff] %v687
          %702 = vst [vmem:[#allocation3 + $0x8] sm:$0xff] %v690
          %703 = vst [vmem:[#allocation3 + $0x10] sm:$0xff] %v695
          %704 = vst [vmem:[#allocation3 + $0x18] sm:$0xff] %v698
        $region100: #{tpu_custom_call.1} parent=67 // pred_fallthru
          _
        %v705 = vld [vmem:[%s486] sm:$0xff]
        %v706 = vunpack.c.l.s8.bf16 %v705
        %v707 = vunpack.c.h.s8.bf16 %v705
        %vm708 = vcmask 261120
        %v710 = vsel %vm708, %v706, 0
        %v713 = vsel %vm708, %v707, 0
        %715 = vmatprep.subr.bf16.mxu0 0
        %716 = vmatpush1.bf16.msra.mxu0 %v577
        %717 = vmatprep.subr.bf16.mxu0 0
        %718 = vmatpush1.bf16.msra.mxu0 %v578
        %719 = vmatprep.subr.bf16.mxu0 0
        %720 = vmatpush1.bf16.msra.mxu0 0
        %721 = vmatprep.subr.bf16.mxu0 0
        %722 = vmatpush1.bf16.msra.mxu0 0
        %723 = vmatprep.subr.bf16.mxu0 0
        %724 = vmatpush1.bf16.msra.mxu0 0
        %725 = vmatprep.subr.bf16.mxu0 0
        %726 = vmatpush1.bf16.msra.mxu0 0
        %727 = vmatprep.subr.bf16.mxu0 0
        %728 = vmatpush1.bf16.msra.mxu0 0
        %729 = vmatprep.subr.bf16.mxu0 0
        %730 = vmatpush1.bf16.msra.mxu0 0
        %731 = vmatprep.subr.bf16.mxu0 0
        %732 = vmatpush1.bf16.msra.mxu0 0
        %733 = vmatprep.subr.bf16.mxu0 0
        %734 = vmatpush1.bf16.msra.mxu0 0
        %735 = vmatprep.subr.bf16.mxu0 0
        %736 = vmatpush1.bf16.msra.mxu0 0
        %737 = vmatprep.subr.bf16.mxu0 0
        %738 = vmatpush1.bf16.msra.mxu0 0
        %739 = vmatprep.subr.bf16.mxu0 0
        %740 = vmatpush1.bf16.msra.mxu0 0
        %741 = vmatprep.subr.bf16.mxu0 0
        %742 = vmatpush1.bf16.msra.mxu0 0
        %743 = vmatprep.subr.bf16.mxu0 0
        %744 = vmatpush1.bf16.msra.mxu0 0
        %745 = vmatprep.subr.bf16.mxu0 0
        %746 = vmatpush1.bf16.msra.mxu0 0
        %747 = vmatprep.mubr.bf16.mxu0 0
        %748 = vmatmul.mubr.bf16.gmra.mrb[0].mxu0 %v710
        %v749 = vpop.f32.mrb[0].mxu0
        %v750 = vadd.f32 0.0, %v749
        %v751 = vpop.f32.mrb[0].mxu0
        %v752 = vpop.f32.mrb[0].mxu0
        %v753 = vadd.f32 0.0, %v752
        %v754 = vpop.f32.mrb[0].mxu0
        %755 = vmatprep.mubr.bf16.mxu0 0
        %756 = vmatmul.mubr.bf16.gmra.mrb[0].mxu0 %v713
        %v757 = vpop.f32.mrb[0].mxu0
        %v758 = vadd.f32 0.0, %v757
        %v759 = vpop.f32.mrb[0].mxu0
        %v760 = vpop.f32.mrb[0].mxu0
        %v761 = vadd.f32 0.0, %v760
        %v762 = vpop.f32.mrb[0].mxu0
        %763 = vdwg.mxu0
        %v764 = vld [vmem:[#allocation3] sm:$0xff]
        %v765 = vld [vmem:[#allocation3 + $0x8] sm:$0xff]
        %v766 = vld [vmem:[#allocation3 + $0x10] sm:$0xff]
        %v767 = vld [vmem:[#allocation3 + $0x18] sm:$0xff]
        %v768 = vpack.c.bf16 %v753, %v750
        %v769 = vpack.c.bf16 %v761, %v758
        %v770 = vld [vmem:[%s504] sm:$0xf]
        %v771 = vld [vmem:[%s504 + $0x4] sm:$0xf]
        %v772 = vld [vmem:[%s504 + $0x8] sm:$0xf]
        %v773 = vld [vmem:[%s504 + $0xc] sm:$0xf]
        %v774 = vld [vmem:[%s504 + $0x10] sm:$0xf]
        %v775 = vld [vmem:[%s504 + $0x14] sm:$0xf]
        %v776 = vld [vmem:[%s504 + $0x18] sm:$0xf]
        %v777 = vld [vmem:[%s504 + $0x1c] sm:$0xf]
        %v778 = vld [vmem:[%s504 + $0x20] sm:$0xf]
        %v779 = vld [vmem:[%s504 + $0x24] sm:$0xf]
        %v780 = vld [vmem:[%s504 + $0x28] sm:$0xf]
        %v781 = vld [vmem:[%s504 + $0x2c] sm:$0xf]
        %v782 = vld [vmem:[%s504 + $0x30] sm:$0xf]
        %v783 = vld [vmem:[%s504 + $0x34] sm:$0xf]
        %v784 = vld [vmem:[%s504 + $0x38] sm:$0xf]
        %v785 = vld [vmem:[%s504 + $0x3c] sm:$0xf]
        %v802 = vunpack.c.l.b16 %v770
        %v803 = vunpack.c.l.b16 %v771
        %v804 = vunpack.c.l.b16 %v772
        %v805 = vunpack.c.l.b16 %v773
        %v806 = vunpack.c.l.b16 %v774
        %v807 = vunpack.c.l.b16 %v775
        %v808 = vunpack.c.l.b16 %v776
        %v809 = vunpack.c.l.b16 %v777
        %v810 = vunpack.c.l.b16 %v778
        %v811 = vunpack.c.l.b16 %v779
        %v812 = vunpack.c.l.b16 %v780
        %v813 = vunpack.c.l.b16 %v781
        %v814 = vunpack.c.l.b16 %v782
        %v815 = vunpack.c.l.b16 %v783
        %v816 = vunpack.c.l.b16 %v784
        %v817 = vunpack.c.l.b16 %v785
        %v818 = vpack.c.b16 %v803, %v802
        %v819 = vpack.c.b16 %v805, %v804
        %v820 = vpack.c.b16 %v807, %v806
        %v821 = vpack.c.b16 %v809, %v808
        %v822 = vpack.c.b16 %v811, %v810
        %v823 = vpack.c.b16 %v813, %v812
        %v824 = vpack.c.b16 %v815, %v814
        %v825 = vpack.c.b16 %v817, %v816
        %834 = vmatprep.subr.bf16.mxu0 0
        %835 = vmatpush1.bf16.msra.mxu0 %v818
        %836 = vmatprep.subr.bf16.mxu0 0
        %837 = vmatpush1.bf16.msra.mxu0 %v819
        %838 = vmatprep.subr.bf16.mxu0 0
        %839 = vmatpush1.bf16.msra.mxu0 %v820
        %840 = vmatprep.subr.bf16.mxu0 0
        %841 = vmatpush1.bf16.msra.mxu0 %v821
        %842 = vmatprep.subr.bf16.mxu0 0
        %843 = vmatpush1.bf16.msra.mxu0 %v822
        %844 = vmatprep.subr.bf16.mxu0 0
        %845 = vmatpush1.bf16.msra.mxu0 %v823
        %846 = vmatprep.subr.bf16.mxu0 0
        %847 = vmatpush1.bf16.msra.mxu0 %v824
        %848 = vmatprep.subr.bf16.mxu0 0
        %849 = vmatpush1.bf16.msra.mxu0 %v825
        %850 = vmatprep.subr.bf16.mxu0 0
        %851 = vmatpush1.bf16.msra.mxu0 0
        %852 = vmatprep.subr.bf16.mxu0 0
        %853 = vmatpush1.bf16.msra.mxu0 0
        %854 = vmatprep.subr.bf16.mxu0 0
        %855 = vmatpush1.bf16.msra.mxu0 0
        %856 = vmatprep.subr.bf16.mxu0 0
        %857 = vmatpush1.bf16.msra.mxu0 0
        %858 = vmatprep.subr.bf16.mxu0 0
        %859 = vmatpush1.bf16.msra.mxu0 0
        %860 = vmatprep.subr.bf16.mxu0 0
        %861 = vmatpush1.bf16.msra.mxu0 0
        %862 = vmatprep.subr.bf16.mxu0 0
        %863 = vmatpush1.bf16.msra.mxu0 0
        %864 = vmatprep.subr.bf16.mxu0 0
        %865 = vmatpush1.bf16.msra.mxu0 0
        %866 = vmatprep.mubr.bf16.mxu0 0
        %867 = vmatmul.mubr.bf16.gmra.mrb[0].mxu0 %v768
        %v868 = vpop.f32.mrb[0].mxu0
        %v869 = vadd.f32 0.0, %v868
        %v870 = vpop.f32.mrb[0].mxu0
        %v871 = vpop.f32.mrb[0].mxu0
        %v872 = vadd.f32 0.0, %v871
        %v873 = vpop.f32.mrb[0].mxu0
        %874 = vmatprep.mubr.bf16.mxu0 0
        %875 = vmatmul.mubr.bf16.gmra.mrb[0].mxu0 %v769
        %v876 = vpop.f32.mrb[0].mxu0
        %v877 = vadd.f32 0.0, %v876
        %v878 = vpop.f32.mrb[0].mxu0
        %v879 = vpop.f32.mrb[0].mxu0
        %v880 = vadd.f32 0.0, %v879
        %v881 = vpop.f32.mrb[0].mxu0
        %882 = vdwg.mxu0
        %v883 = vadd.f32 %v764, %v869
        %v884 = vadd.f32 %v765, %v872
        %v885 = vadd.f32 %v766, %v877
        %v886 = vadd.f32 %v767, %v880
        %887 = vst [vmem:[#allocation3] sm:$0xff] %v883
        %888 = vst [vmem:[#allocation3 + $0x8] sm:$0xff] %v884
        %889 = vst [vmem:[#allocation3 + $0x10] sm:$0xff] %v885
        %890 = vst [vmem:[#allocation3 + $0x18] sm:$0xff] %v886
        %p891 = scmp.eq.s32.totalorder %s37, 4
        %p892 = scmp.eq.s32.totalorder %s36, 1
        %p893 = pnand %p891, %p892
        %p894 = pneg %p893
        // Predicated region
        $region101: #{tpu_custom_call.1} parent=67 // pred_check
          _
        $region102: #{tpu_custom_call.1} parent=67 // pred_check_branch
          %896 = sbr.rel (%p893) target = $region104
        $region103: #{tpu_custom_call.1} parent=67 // pred_region
          %v897 = vld [vmem:[%s2] sm:$0x3]
          %v899 = vsel %vm708, %v897, 0
          %901 = vmatprep.subr.bf16.mxu0 0
          %902 = vmatpush1.bf16.msra.mxu0 %v577
          %903 = vmatprep.subr.bf16.mxu0 0
          %904 = vmatpush1.bf16.msra.mxu0 %v578
          %905 = vmatprep.subr.bf16.mxu0 0
          %906 = vmatpush1.bf16.msra.mxu0 0
          %907 = vmatprep.subr.bf16.mxu0 0
          %908 = vmatpush1.bf16.msra.mxu0 0
          %909 = vmatprep.subr.bf16.mxu0 0
          %910 = vmatpush1.bf16.msra.mxu0 0
          %911 = vmatprep.subr.bf16.mxu0 0
          %912 = vmatpush1.bf16.msra.mxu0 0
          %913 = vmatprep.subr.bf16.mxu0 0
          %914 = vmatpush1.bf16.msra.mxu0 0
          %915 = vmatprep.subr.bf16.mxu0 0
          %916 = vmatpush1.bf16.msra.mxu0 0
          %917 = vmatprep.subr.bf16.mxu0 0
          %918 = vmatpush1.bf16.msra.mxu0 0
          %919 = vmatprep.subr.bf16.mxu0 0
          %920 = vmatpush1.bf16.msra.mxu0 0
          %921 = vmatprep.subr.bf16.mxu0 0
          %922 = vmatpush1.bf16.msra.mxu0 0
          %923 = vmatprep.subr.bf16.mxu0 0
          %924 = vmatpush1.bf16.msra.mxu0 0
          %925 = vmatprep.subr.bf16.mxu0 0
          %926 = vmatpush1.bf16.msra.mxu0 0
          %927 = vmatprep.subr.bf16.mxu0 0
          %928 = vmatpush1.bf16.msra.mxu0 0
          %929 = vmatprep.subr.bf16.mxu0 0
          %930 = vmatpush1.bf16.msra.mxu0 0
          %931 = vmatprep.subr.bf16.mxu0 0
          %932 = vmatpush1.bf16.msra.mxu0 0
          %933 = vmatprep.mubr.bf16.mxu0 0
          %934 = vmatmul.mubr.bf16.gmra.mrb[0].mxu0 %v899
          %v935 = vpop.f32.mrb[0].mxu0
          %v936 = vadd.f32 0.0, %v935
          %v937 = vpop.f32.mrb[0].mxu0
          %v938 = vpop.f32.mrb[0].mxu0
          %v939 = vpop.f32.mrb[0].mxu0
          %940 = vdwg.mxu0
          %v941 = vpack.c.bf16 %v936, %v936
          %v942 = vld [vmem:[#allocation12] sm:$0xf]
          %v943 = vld [vmem:[#allocation12 + $0x4] sm:$0xf]
          %v944 = vld [vmem:[#allocation12 + $0x8] sm:$0xf]
          %v945 = vld [vmem:[#allocation12 + $0xc] sm:$0xf]
          %v946 = vld [vmem:[#allocation12 + $0x10] sm:$0xf]
          %v947 = vld [vmem:[#allocation12 + $0x14] sm:$0xf]
          %v948 = vld [vmem:[#allocation12 + $0x18] sm:$0xf]
          %v949 = vld [vmem:[#allocation12 + $0x1c] sm:$0xf]
          %v950 = vld [vmem:[#allocation12 + $0x20] sm:$0xf]
          %v951 = vld [vmem:[#allocation12 + $0x24] sm:$0xf]
          %v952 = vld [vmem:[#allocation12 + $0x28] sm:$0xf]
          %v953 = vld [vmem:[#allocation12 + $0x2c] sm:$0xf]
          %v954 = vld [vmem:[#allocation12 + $0x30] sm:$0xf]
          %v955 = vld [vmem:[#allocation12 + $0x34] sm:$0xf]
          %v956 = vld [vmem:[#allocation12 + $0x38] sm:$0xf]
          %v957 = vld [vmem:[#allocation12 + $0x3c] sm:$0xf]
          %v958 = vld [vmem:[%s9] sm:$0x1]
          %v960 = vlaneseq
          %v961 = vshrl.u32 %v960, 7
          %v962 = vsub.s32 0, %v961
          %v963 = vrot.slane %v958, %v962
          %v981 = vunpack.c.l.b16 %v942
          %v982 = vunpack.c.l.b16 %v943
          %v983 = vunpack.c.l.b16 %v944
          %v984 = vunpack.c.l.b16 %v945
          %v985 = vunpack.c.l.b16 %v946
          %v986 = vunpack.c.l.b16 %v947
          %v987 = vunpack.c.l.b16 %v948
          %v988 = vunpack.c.l.b16 %v949
          %v989 = vunpack.c.l.b16 %v950
          %v990 = vunpack.c.l.b16 %v951
          %v991 = vunpack.c.l.b16 %v952
          %v992 = vunpack.c.l.b16 %v953
          %v993 = vunpack.c.l.b16 %v954
          %v994 = vunpack.c.l.b16 %v955
          %v995 = vunpack.c.l.b16 %v956
          %v996 = vunpack.c.l.b16 %v957
          %v997 = vpack.c.b16 %v982, %v981
          %v998 = vpack.c.b16 %v984, %v983
          %v999 = vpack.c.b16 %v986, %v985
          %v1000 = vpack.c.b16 %v988, %v987
          %v1001 = vpack.c.b16 %v990, %v989
          %v1002 = vpack.c.b16 %v992, %v991
          %v1003 = vpack.c.b16 %v994, %v993
          %v1004 = vpack.c.b16 %v996, %v995
          %1013 = vmatprep.subr.bf16.mxu0 0
          %1014 = vmatpush1.bf16.msra.mxu0 %v997
          %1015 = vmatprep.subr.bf16.mxu0 0
          %1016 = vmatpush1.bf16.msra.mxu0 %v998
          %1017 = vmatprep.subr.bf16.mxu0 0
          %1018 = vmatpush1.bf16.msra.mxu0 %v999
          %1019 = vmatprep.subr.bf16.mxu0 0
          %1020 = vmatpush1.bf16.msra.mxu0 %v1000
          %1021 = vmatprep.subr.bf16.mxu0 0
          %1022 = vmatpush1.bf16.msra.mxu0 %v1001
          %1023 = vmatprep.subr.bf16.mxu0 0
          %1024 = vmatpush1.bf16.msra.mxu0 %v1002
          %1025 = vmatprep.subr.bf16.mxu0 0
          %1026 = vmatpush1.bf16.msra.mxu0 %v1003
          %1027 = vmatprep.subr.bf16.mxu0 0
          %1028 = vmatpush1.bf16.msra.mxu0 %v1004
          %1029 = vmatprep.subr.bf16.mxu0 0
          %1030 = vmatpush1.bf16.msra.mxu0 0
          %1031 = vmatprep.subr.bf16.mxu0 0
          %1032 = vmatpush1.bf16.msra.mxu0 0
          %1033 = vmatprep.subr.bf16.mxu0 0
          %1034 = vmatpush1.bf16.msra.mxu0 0
          %1035 = vmatprep.subr.bf16.mxu0 0
          %1036 = vmatpush1.bf16.msra.mxu0 0
          %1037 = vmatprep.subr.bf16.mxu0 0
          %1038 = vmatpush1.bf16.msra.mxu0 0
          %1039 = vmatprep.subr.bf16.mxu0 0
          %1040 = vmatpush1.bf16.msra.mxu0 0
          %1041 = vmatprep.subr.bf16.mxu0 0
          %1042 = vmatpush1.bf16.msra.mxu0 0
          %1043 = vmatprep.subr.bf16.mxu0 0
          %1044 = vmatpush1.bf16.msra.mxu0 0
          %1045 = vmatprep.mubr.bf16.mxu0 0
          %1046 = vmatmul.mubr.bf16.gmra.mrb[0].mxu0 %v941
          %v1047 = vpop.f32.mrb[0].mxu0
          %v1048 = vadd.f32 %v963, %v1047
          %v1049 = vpop.f32.mrb[0].mxu0
          %v1050 = vpop.f32.mrb[0].mxu0
          %v1051 = vpop.f32.mrb[0].mxu0
          %1052 = vdwg.mxu0
          %v1053 = vpack.c.bf16 %v1048, %v1048
          %1054 = vxpose.xlu0.c.b16.start [1/8] %v897, 128
          %1055 = vxpose.xlu0.c.b16.cont [2/8] 0, 128
          %1056 = vxpose.xlu0.c.b16.cont [3/8] 0, 128
          %1057 = vxpose.xlu0.c.b16.cont [4/8] 0, 128
          %1058 = vxpose.xlu0.c.b16.cont [5/8] 0, 128
          %1059 = vxpose.xlu0.c.b16.cont [6/8] 0, 128
          %1060 = vxpose.xlu0.c.b16.cont [7/8] 0, 128
          %1061 = vxpose.xlu0.c.b16.end [8/8] 0, 128
          %v1062 = vpop.trf.xlu0
          %v1063 = vpop.trf.xlu0
          %v1064 = vpop.trf.xlu0
          %v1065 = vpop.trf.xlu0
          %v1066 = vpop.trf.xlu0
          %v1067 = vpop.trf.xlu0
          %v1068 = vpop.trf.xlu0
          %v1069 = vpop.trf.xlu0
          %vm1070 = vcmask 31744
          %v1072 = vsel %vm1070, %v1062, 0
          %v1075 = vsel %vm1070, %v1063, 0
          %vm1077 = vcmask 1041408
          %v1079 = vsel %vm1077, %v1053, 0
          %1081 = vmatprep.subr.bf16.mxu0 0
          %1082 = vmatpush1.bf16.msra.mxu0 %v1079
          %1083 = vmatprep.subr.bf16.mxu0 0
          %1084 = vmatpush1.bf16.msra.mxu0 0
          %1085 = vmatprep.subr.bf16.mxu0 0
          %1086 = vmatpush1.bf16.msra.mxu0 0
          %1087 = vmatprep.subr.bf16.mxu0 0
          %1088 = vmatpush1.bf16.msra.mxu0 0
          %1089 = vmatprep.subr.bf16.mxu0 0
          %1090 = vmatpush1.bf16.msra.mxu0 0
          %1091 = vmatprep.subr.bf16.mxu0 0
          %1092 = vmatpush1.bf16.msra.mxu0 0
          %1093 = vmatprep.subr.bf16.mxu0 0
          %1094 = vmatpush1.bf16.msra.mxu0 0
          %1095 = vmatprep.subr.bf16.mxu0 0
          %1096 = vmatpush1.bf16.msra.mxu0 0
          %1097 = vmatprep.subr.bf16.mxu0 0
          %1098 = vmatpush1.bf16.msra.mxu0 0
          %1099 = vmatprep.subr.bf16.mxu0 0
          %1100 = vmatpush1.bf16.msra.mxu0 0
          %1101 = vmatprep.subr.bf16.mxu0 0
          %1102 = vmatpush1.bf16.msra.mxu0 0
          %1103 = vmatprep.subr.bf16.mxu0 0
          %1104 = vmatpush1.bf16.msra.mxu0 0
          %1105 = vmatprep.subr.bf16.mxu0 0
          %1106 = vmatpush1.bf16.msra.mxu0 0
          %1107 = vmatprep.subr.bf16.mxu0 0
          %1108 = vmatpush1.bf16.msra.mxu0 0
          %1109 = vmatprep.subr.bf16.mxu0 0
          %1110 = vmatpush1.bf16.msra.mxu0 0
          %1111 = vmatprep.subr.bf16.mxu0 0
          %1112 = vmatpush1.bf16.msra.mxu0 0
          %1113 = vmatprep.mubr.bf16.mxu0 0
          %1114 = vmatmul.mubr.bf16.gmra.mrb[0].mxu0 %v1072
          %v1115 = vpop.f32.mrb[0].mxu0
          %v1116 = vadd.f32 0.0, %v1115
          %v1117 = vpop.f32.mrb[0].mxu0
          %v1118 = vpop.f32.mrb[0].mxu0
          %v1119 = vadd.f32 0.0, %v1118
          %v1120 = vpop.f32.mrb[0].mxu0
          %1121 = vmatprep.mubr.bf16.mxu0 0
          %1122 = vmatmul.mubr.bf16.gmra.mrb[0].mxu0 %v1075
          %v1123 = vpop.f32.mrb[0].mxu0
          %v1124 = vadd.f32 0.0, %v1123
          %v1125 = vpop.f32.mrb[0].mxu0
          %v1126 = vpop.f32.mrb[0].mxu0
          %v1127 = vadd.f32 0.0, %v1126
          %v1128 = vpop.f32.mrb[0].mxu0
          %1129 = vdwg.mxu0
          %v1130 = vld [vmem:[#allocation3] sm:$0xff]
          %v1131 = vld [vmem:[#allocation3 + $0x8] sm:$0xff]
          %v1132 = vld [vmem:[#allocation3 + $0x10] sm:$0xff]
          %v1133 = vld [vmem:[#allocation3 + $0x18] sm:$0xff]
          %v1134 = vadd.f32 %v1130, %v1116
          %v1135 = vadd.f32 %v1131, %v1119
          %v1136 = vadd.f32 %v1132, %v1124
          %v1137 = vadd.f32 %v1133, %v1127
          %1138 = vst [vmem:[#allocation3] sm:$0xff] %v1134
          %1139 = vst [vmem:[#allocation3 + $0x8] sm:$0xff] %v1135
          %1140 = vst [vmem:[#allocation3 + $0x10] sm:$0xff] %v1136
          %1141 = vst [vmem:[#allocation3 + $0x18] sm:$0xff] %v1137
        $region104: #{tpu_custom_call.1} parent=67 // pred_fallthru
          _
        // Predicated region
        $region105: #{tpu_custom_call.1} parent=67 // pred_check
          %p1142 = pneg %p891
        $region106: #{tpu_custom_call.1} parent=67 // pred_check_branch
          %1144 = sbr.rel (%p1142) target = $region108
        $region107: #{tpu_custom_call.1} parent=67 // pred_region
          %v1145 = vld [vmem:[#allocation3] sm:$0xff]
          %v1146 = vld [vmem:[#allocation3 + $0x8] sm:$0xff]
          %v1147 = vld [vmem:[#allocation3 + $0x10] sm:$0xff]
          %v1148 = vld [vmem:[#allocation3 + $0x18] sm:$0xff]
          %v1149 = vmax.f32 %v1145, 0.0
          %v1150 = vmax.f32 %v1146, 0.0
          %v1151 = vmax.f32 %v1147, 0.0
          %v1152 = vmax.f32 %v1148, 0.0
          %v1153 = vadd.f32 %v1149, %v1150
          %v1154 = vadd.f32 %v1153, %v1151
          %v1155 = vadd.f32 %v1154, %v1152
          %v1156 = vrot.slane %v1155, 4
          %v1157 = vadd.f32 %v1155, %v1156
          %v1158 = vrot.slane %v1157, 2
          %v1159 = vadd.f32 %v1157, %v1158
          %v1160 = vrot.slane %v1159, 1
          %v1161 = vadd.f32 %v1159, %v1160
          %v1162 = vmul.f32 %v1161, 0.03125
          %v1163 = vsub.f32 %v1149, %v1162
          %v1164 = vsub.f32 %v1150, %v1162
          %v1165 = vsub.f32 %v1151, %v1162
          %v1166 = vsub.f32 %v1152, %v1162
          %v1167 = vmul.f32 %v1163, %v1163
          %v1168 = vmul.f32 %v1164, %v1164
          %v1169 = vmul.f32 %v1165, %v1165
          %v1170 = vmul.f32 %v1166, %v1166
          %v1171 = vadd.f32 %v1167, %v1168
          %v1172 = vadd.f32 %v1171, %v1169
          %v1173 = vadd.f32 %v1172, %v1170
          %v1174 = vrot.slane %v1173, 4
          %v1175 = vadd.f32 %v1173, %v1174
          %v1176 = vrot.slane %v1175, 2
          %v1177 = vadd.f32 %v1175, %v1176
          %v1178 = vrot.slane %v1177, 1
          %v1179 = vadd.f32 %v1177, %v1178
          %v1180 = vmul.f32 %v1179, 0.03125
          %s1181 = scalar_lea.vmem %s6, %s36
          %v1182 = vld [vmem:[%s1181] sm:$0x1]
          %s1183 = scalar_lea.vmem %s7, %s36
          %v1184 = vld [vmem:[%s1183] sm:$0x1]
          %v1185 = vadd.f32 %v1180, 1e-05
          %v1186 = vrsqrt.pop %v1185
          %v1187 = vmul.f32 %v1163, %v1186
          %v1188 = vmul.f32 %v1164, %v1186
          %v1189 = vmul.f32 %v1165, %v1186
          %v1190 = vmul.f32 %v1166, %v1186
          %v1191 = vlaneseq
          %v1192 = vshrl.u32 %v1191, 7
          %v1193 = vsub.s32 0, %v1192
          %v1194 = vrot.slane %v1182, %v1193
          %v1195 = vmul.f32 %v1187, %v1194
          %v1196 = vmul.f32 %v1188, %v1194
          %v1197 = vmul.f32 %v1189, %v1194
          %v1198 = vmul.f32 %v1190, %v1194
          %v1199 = vlaneseq
          %v1200 = vshrl.u32 %v1199, 7
          %v1201 = vsub.s32 0, %v1200
          %v1202 = vrot.slane %v1184, %v1201
          %v1203 = vadd.f32 %v1195, %v1202
          %v1204 = vadd.f32 %v1196, %v1202
          %v1205 = vadd.f32 %v1197, %v1202
          %v1206 = vadd.f32 %v1198, %v1202
          %1207 = vst [vmem:[#allocation2] sm:$0xff] %v1203
          %1208 = vst [vmem:[#allocation2 + $0x8] sm:$0xff] %v1204
          %1209 = vst [vmem:[#allocation2 + $0x10] sm:$0xff] %v1205
          %1210 = vst [vmem:[#allocation2 + $0x18] sm:$0xff] %v1206
        $region108: #{tpu_custom_call.1} parent=67 // pred_fallthru
          _
        // Predicated region
        $region109: #{tpu_custom_call.1} parent=67 // pred_check
          _
        $region110: #{tpu_custom_call.1} parent=67 // pred_check_branch
          %1212 = sbr.rel (%p893) target = $region112
        $region111: #{tpu_custom_call.1} parent=67 // pred_region
          %v1213 = vld [vmem:[#allocation2] sm:$0xff]
          %v1214 = vld [vmem:[#allocation2 + $0x8] sm:$0xff]
          %v1215 = vld [vmem:[#allocation2 + $0x10] sm:$0xff]
          %v1216 = vld [vmem:[#allocation2 + $0x18] sm:$0xff]
          %v1217 = vpack.c.bf16 %v1214, %v1213
          %v1218 = vpack.c.bf16 %v1216, %v1215
          %v1219 = vld [vmem:[#allocation13] sm:$0xf]
          %v1220 = vld [vmem:[#allocation13 + $0x4] sm:$0xf]
          %v1221 = vld [vmem:[#allocation13 + $0x8] sm:$0xf]
          %v1222 = vld [vmem:[#allocation13 + $0xc] sm:$0xf]
          %v1223 = vld [vmem:[#allocation13 + $0x10] sm:$0xf]
          %v1224 = vld [vmem:[#allocation13 + $0x14] sm:$0xf]
          %v1225 = vld [vmem:[#allocation13 + $0x18] sm:$0xf]
          %v1226 = vld [vmem:[#allocation13 + $0x1c] sm:$0xf]
          %v1227 = vld [vmem:[#allocation13 + $0x20] sm:$0xf]
          %v1228 = vld [vmem:[#allocation13 + $0x24] sm:$0xf]
          %v1229 = vld [vmem:[#allocation13 + $0x28] sm:$0xf]
          %v1230 = vld [vmem:[#allocation13 + $0x2c] sm:$0xf]
          %v1231 = vld [vmem:[#allocation13 + $0x30] sm:$0xf]
          %v1232 = vld [vmem:[#allocation13 + $0x34] sm:$0xf]
          %v1233 = vld [vmem:[#allocation13 + $0x38] sm:$0xf]
          %v1234 = vld [vmem:[#allocation13 + $0x3c] sm:$0xf]
          %v1235 = vld [vmem:[%s11] sm:$0x1]
          %v1237 = vlaneseq
          %v1238 = vshrl.u32 %v1237, 7
          %v1239 = vsub.s32 0, %v1238
          %v1240 = vrot.slane %v1235, %v1239
          %v1258 = vunpack.c.l.b16 %v1219
          %v1259 = vunpack.c.l.b16 %v1220
          %v1260 = vunpack.c.l.b16 %v1221
          %v1261 = vunpack.c.l.b16 %v1222
          %v1262 = vunpack.c.l.b16 %v1223
          %v1263 = vunpack.c.l.b16 %v1224
          %v1264 = vunpack.c.l.b16 %v1225
          %v1265 = vunpack.c.l.b16 %v1226
          %v1266 = vunpack.c.l.b16 %v1227
          %v1267 = vunpack.c.l.b16 %v1228
          %v1268 = vunpack.c.l.b16 %v1229
          %v1269 = vunpack.c.l.b16 %v1230
          %v1270 = vunpack.c.l.b16 %v1231
          %v1271 = vunpack.c.l.b16 %v1232
          %v1272 = vunpack.c.l.b16 %v1233
          %v1273 = vunpack.c.l.b16 %v1234
          %v1274 = vpack.c.b16 %v1259, %v1258
          %v1275 = vpack.c.b16 %v1261, %v1260
          %v1276 = vpack.c.b16 %v1263, %v1262
          %v1277 = vpack.c.b16 %v1265, %v1264
          %v1278 = vpack.c.b16 %v1267, %v1266
          %v1279 = vpack.c.b16 %v1269, %v1268
          %v1280 = vpack.c.b16 %v1271, %v1270
          %v1281 = vpack.c.b16 %v1273, %v1272
          %1290 = vmatprep.subr.bf16.mxu0 0
          %1291 = vmatpush1.bf16.msra.mxu0 %v1274
          %1292 = vmatprep.subr.bf16.mxu0 0
          %1293 = vmatpush1.bf16.msra.mxu0 %v1275
          %1294 = vmatprep.subr.bf16.mxu0 0
          %1295 = vmatpush1.bf16.msra.mxu0 %v1276
          %1296 = vmatprep.subr.bf16.mxu0 0
          %1297 = vmatpush1.bf16.msra.mxu0 %v1277
          %1298 = vmatprep.subr.bf16.mxu0 0
          %1299 = vmatpush1.bf16.msra.mxu0 %v1278
          %1300 = vmatprep.subr.bf16.mxu0 0
          %1301 = vmatpush1.bf16.msra.mxu0 %v1279
          %1302 = vmatprep.subr.bf16.mxu0 0
          %1303 = vmatpush1.bf16.msra.mxu0 %v1280
          %1304 = vmatprep.subr.bf16.mxu0 0
          %1305 = vmatpush1.bf16.msra.mxu0 %v1281
          %1306 = vmatprep.subr.bf16.mxu0 0
          %1307 = vmatpush1.bf16.msra.mxu0 0
          %1308 = vmatprep.subr.bf16.mxu0 0
          %1309 = vmatpush1.bf16.msra.mxu0 0
          %1310 = vmatprep.subr.bf16.mxu0 0
          %1311 = vmatpush1.bf16.msra.mxu0 0
          %1312 = vmatprep.subr.bf16.mxu0 0
          %1313 = vmatpush1.bf16.msra.mxu0 0
          %1314 = vmatprep.subr.bf16.mxu0 0
          %1315 = vmatpush1.bf16.msra.mxu0 0
          %1316 = vmatprep.subr.bf16.mxu0 0
          %1317 = vmatpush1.bf16.msra.mxu0 0
          %1318 = vmatprep.subr.bf16.mxu0 0
          %1319 = vmatpush1.bf16.msra.mxu0 0
          %1320 = vmatprep.subr.bf16.mxu0 0
          %1321 = vmatpush1.bf16.msra.mxu0 0
          %1322 = vmatprep.mubr.bf16.mxu0 0
          %1323 = vmatmul.mubr.bf16.gmra.mrb[0].mxu0 %v1217
          %v1324 = vpop.f32.mrb[0].mxu0
          %v1325 = vadd.f32 %v1240, %v1324
          %v1326 = vpop.f32.mrb[0].mxu0
          %v1327 = vpop.f32.mrb[0].mxu0
          %v1328 = vadd.f32 %v1240, %v1327
          %v1329 = vpop.f32.mrb[0].mxu0
          %1330 = vmatprep.mubr.bf16.mxu0 0
          %1331 = vmatmul.mubr.bf16.gmra.mrb[0].mxu0 %v1218
          %v1332 = vpop.f32.mrb[0].mxu0
          %v1333 = vadd.f32 %v1240, %v1332
          %v1334 = vpop.f32.mrb[0].mxu0
          %v1335 = vpop.f32.mrb[0].mxu0
          %v1336 = vadd.f32 %v1240, %v1335
          %v1337 = vpop.f32.mrb[0].mxu0
          %1338 = vdwg.mxu0
          %1339 = vst [vmem:[#allocation15] sm:$0xff] %v1325
          %1340 = vst [vmem:[#allocation15 + $0x8] sm:$0xff] %v1328
          %1341 = vst [vmem:[#allocation15 + $0x10] sm:$0xff] %v1333
          %1342 = vst [vmem:[#allocation15 + $0x18] sm:$0xff] %v1336
        $region112: #{tpu_custom_call.1} parent=67 // pred_fallthru
          _
        // Predicated region
        $region113: #{tpu_custom_call.1} parent=67 // pred_check
          %p1343 = pneg %p328
        $region114: #{tpu_custom_call.1} parent=67 // pred_check_branch
          %1345 = sbr.rel (%p1343) target = $region116
        $region115: #{tpu_custom_call.1} parent=67 // pred_region
          %s1347 = ssub.s32 512, 512
          %1348 = vsyncadd [#allocation6], %s1347
          %s1349 = sshll.u32 [#allocation15], 4
          %s1350 = int_to_ptr.vmem [resolvable:$true] %s1349
          %1355 = dma.vmem_to_hbm [thread:$0]  %s1350, 512, %s12, [#allocation6], 128, 128, 8
        $region116: #{tpu_custom_call.1} parent=67 // pred_fallthru
          _
        // Predicated region
        $region117: #{tpu_custom_call.1} parent=67 // pred_check
          %p1356 = pneg %p328
        $region118: #{tpu_custom_call.1} parent=67 // pred_check_branch
          %1358 = sbr.rel (%p1356) target = $region120
        $region119: #{tpu_custom_call.1} parent=67 // pred_region
          %1359 = dma.done [#allocation6], 512
        $region120: #{tpu_custom_call.1} parent=67 // pred_fallthru
          _
      $region68: #{tpu_custom_call.1} parent=5 // pred_fallthru
        _
      %p1360 = scmp.le.s32.totalorder 2, %s27
      // Predicated region
      $region121: #{tpu_custom_call.1} parent=5 // pred_check
        %p1361 = pneg %p1360
      $region122: #{tpu_custom_call.1} parent=5 // pred_check_branch
        %1363 = sbr.rel (%p1361) target = $region124
      $region123: #{tpu_custom_call.1} parent=5 // pred_region
        %s1364 = ssub.s32 %s27, 2
      $region124: #{tpu_custom_call.1} parent=5 // pred_fallthru
        _
    $region6: #{tpu_custom_call.1} parent=1 // loop_footer
      %s31 = sadd.s32 1, %s27
    $region7: #{tpu_custom_call.1} parent=1 // loop_footer_branch
      %26 = sbr.rel target = $region3
    $region8: #{tpu_custom_call.1} parent=1 // loop_exit
      _
    %1365 = vsyncpa [#allocation5], 1
    %s1366 = scalar_lea.sflag [#allocation5], 1
    %1367 = vsyncpa %s1366, 1
    %1368 = vsyncpa [#allocation8], 1
    %s1369 = scalar_lea.sflag [#allocation8], 1
    %1370 = vsyncpa %s1369, 1
    %1371 = vsyncpa [#allocation11], 1
    %s1372 = scalar_lea.sflag [#allocation11], 1
    %1373 = vsyncpa %s1372, 1
    %1374 = vsyncpa [#allocation14], 1
    %1375 = vsyncpa [#allocation6], 1
    %s1376 = scalar_lea.sflag [#allocation6], 1
    %1377 = vsyncpa %s1376, 1

</llo_original>
